<compile_context>
chip_gen: v7x
topology: tpu7x:2x2x1
jax: 0.10.0
libtpu: 0.0.40
codegen_flags: <defaults>
</compile_context>

<pallas_src>
import functools

import jax
import jax.numpy as jnp
from jax import lax
from jax.experimental import pallas as pl
from jax.experimental.pallas import tpu as pltpu

# ---- module hyper-parameters (from the PyTorch script) ----
VOCAB_SIZE = 30522
EMBEDDING_DIM = 128
N_FILTERS = 128
FILTER_SIZES = (3, 4, 5)          # kernel below assumes consecutive sizes starting at 3
K_MAX = max(FILTER_SIZES)
CONV_OUT = len(FILTER_SIZES) * N_FILTERS      # 384
OUTPUT_DIM = 6
OUT_PAD = 128                                 # lane-dense fc output slab
PADDING_IDX = 0


def _round_up(x, m):
    return (x + m - 1) // m * m


def _pick_block_batch(b, l_out, l_pad):
    """Examples per grid step: amortize per-step overhead, keep VMEM in budget."""
    per_ex = (2 * l_pad * EMBEDDING_DIM * 2          # x block (bf16, double-buffered)
              + K_MAX * l_out * EMBEDDING_DIM * 2    # shifted tap copies (bf16)
              + 3 * l_out * CONV_OUT * 4)            # f32 conv accumulators / masks
    cap = max(8, (12 << 20) // per_ex)               # block working set <= ~12 MiB
    if b <= 8:
        return b                                     # tiny batch: one full-dim block
    bb = min(32, -(-b // 2), cap)                    # keep >=2 grid steps (v7x: 2 TCs)
    return max(8, (bb // 8) * 8)                     # multiple of 8 -> dense out stores


def _textcnn_kernel(x_ref, wconv_ref, bconv_ref, wfc_ref, bfc_ref, out_ref,
                    *, seq_len, l_out, bb):
    """One batch block (bb examples) per grid step.

    x_ref    : (bb, l_pad, E)   bf16  padded token embeddings, l_pad = l_out + K_MAX - 1
    wconv_ref: (K_MAX, E, 3*F)  bf16  merged conv weights (taps beyond each fs zero)
    bconv_ref: (1, 3*F)         f32   merged conv biases
    wfc_ref  : (3*F, 128)       f32   fc @ fuse folded, columns >= 6 zero
    bfc_ref  : (1, 128)         f32   folded fc/fuse bias, columns >= 6 zero
    out_ref  : (bb, 128)        f32
    """
    f = N_FILTERS
    m = bb * l_out

    x = x_ref[...]                                            # (bb, l_pad, E) bf16
    # Shifted tap windows stacked into the MXU M dimension.  l_out is a multiple
    # of 8, so the (bb, l_out, E) -> (m, E) merge is layout-free; only the j-shift
    # slice is a sublane relayout.
    xt = [x[:, j:j + l_out, :].reshape(m, EMBEDDING_DIM) for j in range(K_MAX)]

    def dot(a, w):
        return jnp.dot(a, w, preferred_element_type=jnp.float32)

    # Taps 0..2 contribute to all three filter groups, tap 3 only to fs=4/5,
    # tap 4 only to fs=5 -> the zero-padded 20% of conv FLOPs is never issued.
    acc012 = (dot(xt[0], wconv_ref[0]) + dot(xt[1], wconv_ref[1])
              + dot(xt[2], wconv_ref[2]))                     # (m, 3F) f32
    acc3 = dot(xt[3], wconv_ref[3][:, f:])                    # (m, 2F): groups fs=4,5
    acc4 = dot(xt[4], wconv_ref[4][:, 2 * f:])                # (m, F) : group  fs=5

    groups = (
        acc012[:, :f],                                        # fs = 3
        acc012[:, f:2 * f] + acc3[:, :f],                     # fs = 4
        acc012[:, 2 * f:] + acc3[:, f:] + acc4,               # fs = 5
    )

    # Masked global max-pool over time per filter group (valid t <= L - fs), then
    # bias + ReLU after the (monotone) pool.  Dropout = identity in eval mode.
    pooled_parts = []
    for g, fs in enumerate(FILTER_SIZES):
        a3 = groups[g].reshape(bb, l_out, f)
        t = lax.broadcasted_iota(jnp.int32, a3.shape, 1)
        pooled_parts.append(
            jnp.max(jnp.where(t <= seq_len - fs, a3, -jnp.inf), axis=1))  # (bb, F)
    pooled = jnp.concatenate(pooled_parts, axis=-1)           # (bb, 3F)
    pooled = jnp.maximum(pooled + bconv_ref[...], 0.0)

    # Folded fc(+fuse) once for the whole batch block, lane-padded to 128 columns.
    out_ref[...] = dot(pooled, wfc_ref[...]) + bfc_ref[...]   # (bb, 128) f32


def make_params(key):
    ks = jax.random.split(key, 11)

    def uni(k, shape, fan_in):
        bound = 1.0 / jnp.sqrt(jnp.float32(fan_in))
        return jax.random.uniform(k, shape, jnp.float32, -bound, bound)

    # nn.Embedding(vocab, E, padding_idx=0): padding row zeroed.
    emb = jax.random.normal(ks[0], (VOCAB_SIZE, EMBEDDING_DIM), jnp.float32) * 0.02
    emb = emb.at[PADDING_IDX].set(0.0)

    # Per-branch Conv1d(E, F, fs) weights stored as (fs, E, F); zero-pad the tap axis
    # to K_MAX and concatenate along F -> one merged (K_MAX, E, 3F) weight.
    w_parts, b_parts = [], []
    for i, fs in enumerate(FILTER_SIZES):
        fan_in = EMBEDDING_DIM * fs
        w = uni(ks[1 + 2 * i], (fs, EMBEDDING_DIM, N_FILTERS), fan_in)
        b = uni(ks[2 + 2 * i], (1, N_FILTERS), fan_in)
        w = jnp.concatenate(
            [w, jnp.zeros((K_MAX - fs, EMBEDDING_DIM, N_FILTERS), jnp.float32)], axis=0)
        w_parts.append(w)
        b_parts.append(b)
    w_conv = jnp.concatenate(w_parts, axis=-1)            # (K_MAX, E, 3F)
    b_conv = jnp.concatenate(b_parts, axis=-1)            # (1, 3F)

    # fc(384->6) and fuse(6->6) folded: y = (x @ Wfc + bfc) @ Wfuse + bfuse
    wfc = uni(ks[7], (CONV_OUT, OUTPUT_DIM), CONV_OUT)
    bfc = uni(ks[8], (1, OUTPUT_DIM), CONV_OUT)
    wfuse = uni(ks[9], (OUTPUT_DIM, OUTPUT_DIM), OUTPUT_DIM)
    bfuse = uni(ks[10], (1, OUTPUT_DIM), OUTPUT_DIM)
    w_folded = wfc @ wfuse                                 # (384, 6)
    b_folded = bfc @ wfuse + bfuse                         # (1, 6)
    w_fc = jnp.zeros((CONV_OUT, OUT_PAD), jnp.float32).at[:, :OUTPUT_DIM].set(w_folded)
    b_fc = jnp.zeros((1, OUT_PAD), jnp.float32).at[:, :OUTPUT_DIM].set(b_folded)

    return {
        "emb": emb.astype(jnp.bfloat16),
        "w_conv": w_conv.astype(jnp.bfloat16),
        "b_conv": b_conv,                                  # f32: post-pool VPU math stays f32
        "w_fc": w_fc,                                      # f32 (tiny; avoids fc drift)
        "b_fc": b_fc,                                      # f32
    }


@jax.jit
def liar_model_forward(params, text, metadata_text, metadata_number, justification):
    # LiarModel.forward only consumes `justification`; the other inputs are ignored.
    del text, metadata_text, metadata_number
    B, L = justification.shape
    assert L >= K_MAX, "sequence must be at least as long as the largest filter"

    # Conv output rows per example, padded to a multiple of 8 (MXU-M friendly).
    l_out = _round_up(L - (FILTER_SIZES[0] - 1), 8)
    l_pad = l_out + K_MAX - 1
    bb = _pick_block_batch(B, l_out, l_pad)
    b_pad = _round_up(B, bb)

    # Pad the token ids (not the gathered activations): padding_idx row of the
    # embedding table is zero, so padded positions embed to zeros.  The gather
    # itself stays in XLA (data-dependent row gather).
    # TODO(synk): fuse the embedding gather into the kernel (scalar-prefetched ids
    # + per-row DMA) to avoid one HBM round trip on the activations for large B*L.
    ids = jnp.pad(justification, ((0, b_pad - B), (0, l_pad - L)),
                  constant_values=PADDING_IDX)
    x = params["emb"][ids]                                 # (b_pad, l_pad, E) bf16

    kernel = functools.partial(_textcnn_kernel, seq_len=L, l_out=l_out, bb=bb)

    flops = (2 * b_pad * l_out * EMBEDDING_DIM * N_FILTERS * sum(FILTER_SIZES)
             + 2 * b_pad * CONV_OUT * OUT_PAD)
    bytes_accessed = (b_pad * l_pad * EMBEDDING_DIM * 2
                      + K_MAX * EMBEDDING_DIM * CONV_OUT * 2
                      + CONV_OUT * OUT_PAD * 4 + (CONV_OUT + OUT_PAD) * 4
                      + b_pad * OUT_PAD * 4)

    out = pl.pallas_call(
        kernel,
        out_shape=jax.ShapeDtypeStruct((b_pad, OUT_PAD), jnp.float32),
        grid_spec=pltpu.PrefetchScalarGridSpec(
            num_scalar_prefetch=0,
            grid=(b_pad // bb,),
            in_specs=[
                pl.BlockSpec((bb, l_pad, EMBEDDING_DIM), lambda i: (i, 0, 0)),
                pl.BlockSpec((K_MAX, EMBEDDING_DIM, CONV_OUT), lambda i: (0, 0, 0)),
                pl.BlockSpec((1, CONV_OUT), lambda i: (0, 0)),
                pl.BlockSpec((CONV_OUT, OUT_PAD), lambda i: (0, 0)),
                pl.BlockSpec((1, OUT_PAD), lambda i: (0, 0)),
            ],
            out_specs=pl.BlockSpec((bb, OUT_PAD), lambda i: (i, 0)),
        ),
        compiler_params=pltpu.CompilerParams(
            dimension_semantics=("parallel",)),
        cost_estimate=pl.CostEstimate(
            flops=flops, transcendentals=0, bytes_accessed=bytes_accessed),
    )(x, params["w_conv"], params["b_conv"], params["w_fc"], params["b_fc"])

    return out[:B, :OUTPUT_DIM]                            # (B, 6) f32


if __name__ == "__main__":
    key = jax.random.PRNGKey(0)
    pkey, k_text, k_mtext, k_mnum, k_just = jax.random.split(key, 5)

    params = make_params(pkey)

    B = 2       # batch
    L = 8       # sequence length (>= max filter size 5)

    text = jax.random.randint(k_text, (B, L), 0, VOCAB_SIZE, jnp.int32)            # unused
    metadata_text = jax.random.randint(k_mtext, (B, L), 0, VOCAB_SIZE, jnp.int32)  # unused
    metadata_number = jax.random.normal(k_mnum, (B, 6 * 10), jnp.float32)          # unused
    justification = jax.random.randint(k_just, (B, L), 0, VOCAB_SIZE, jnp.int32)

    out = liar_model_forward(params, text, metadata_text, metadata_number, justification)
    jax.block_until_ready(out)
    assert out.shape == (B, OUTPUT_DIM)
    print("KERNEL_OK")
</pallas_src>

<mosaic_0001>
module attributes {stable_mosaic.version = 11 : i64} {
  func.func @_textcnn_kernel(%arg0: i32, %arg1: memref<2x12x128xbf16, #tpu.memory_space<vmem>>, %arg2: memref<5x128x384xbf16, #tpu.memory_space<vmem>>, %arg3: memref<1x384xf32, #tpu.memory_space<vmem>>, %arg4: memref<384x128xf32, #tpu.memory_space<vmem>>, %arg5: memref<1x128xf32, #tpu.memory_space<vmem>>, %arg6: memref<2x128xf32, #tpu.memory_space<vmem>>) attributes {dimension_semantics = [#tpu.dimension_semantics<parallel>], iteration_bounds = array<i64: 1>, scalar_prefetch = 0 : i64, scratch_operands = 0 : i64, tpu.core_type = #tpu.core_type<tc>, window_params = [{transform_indices = @transform_0, window_bounds = array<i64: 2, 12, 128>}, {pipeline_mode = #tpu.pipeline_mode<synchronous>, transform_indices = @transform_1, window_bounds = array<i64: 5, 128, 384>}, {pipeline_mode = #tpu.pipeline_mode<synchronous>, transform_indices = @transform_2, window_bounds = array<i64: 1, 384>}, {pipeline_mode = #tpu.pipeline_mode<synchronous>, transform_indices = @transform_3, window_bounds = array<i64: 384, 128>}, {pipeline_mode = #tpu.pipeline_mode<synchronous>, transform_indices = @transform_4, window_bounds = array<i64: 1, 128>}, {transform_indices = @transform_5, window_bounds = array<i64: 2, 128>}]} {
    %c0 = arith.constant 0 : index
    %c0_0 = arith.constant 0 : index
    %c0_1 = arith.constant 0 : index
    %0 = vector.load %arg1[%c0, %c0_0, %c0_1] : memref<2x12x128xbf16, #tpu.memory_space<vmem>>, vector<2x12x128xbf16>
    %1 = vector.extract_strided_slice %0 {offsets = [0, 0, 0], sizes = [2, 8, 128], strides = [1, 1, 1]} : vector<2x12x128xbf16> to vector<2x8x128xbf16>
    %2 = vector.shape_cast %1 : vector<2x8x128xbf16> to vector<16x128xbf16>
    %3 = vector.extract_strided_slice %0 {offsets = [0, 1, 0], sizes = [2, 8, 128], strides = [1, 1, 1]} : vector<2x12x128xbf16> to vector<2x8x128xbf16>
    %4 = vector.shape_cast %3 : vector<2x8x128xbf16> to vector<16x128xbf16>
    %5 = vector.extract_strided_slice %0 {offsets = [0, 2, 0], sizes = [2, 8, 128], strides = [1, 1, 1]} : vector<2x12x128xbf16> to vector<2x8x128xbf16>
    %6 = vector.shape_cast %5 : vector<2x8x128xbf16> to vector<16x128xbf16>
    %7 = vector.extract_strided_slice %0 {offsets = [0, 3, 0], sizes = [2, 8, 128], strides = [1, 1, 1]} : vector<2x12x128xbf16> to vector<2x8x128xbf16>
    %8 = vector.shape_cast %7 : vector<2x8x128xbf16> to vector<16x128xbf16>
    %9 = vector.extract_strided_slice %0 {offsets = [0, 4, 0], sizes = [2, 8, 128], strides = [1, 1, 1]} : vector<2x12x128xbf16> to vector<2x8x128xbf16>
    %10 = vector.shape_cast %9 : vector<2x8x128xbf16> to vector<16x128xbf16>
    %c0_2 = arith.constant 0 : index
    %c0_3 = arith.constant 0 : index
    %c0_4 = arith.constant 0 : index
    %11 = vector.load %arg2[%c0_2, %c0_3, %c0_4] : memref<5x128x384xbf16, #tpu.memory_space<vmem>>, vector<1x128x384xbf16>
    %12 = vector.shape_cast %11 : vector<1x128x384xbf16> to vector<128x384xbf16>
    %cst = arith.constant dense<0.000000e+00> : vector<16x384xf32>
    %13 = tpu.matmul %2, %12, %cst {dimension_numbers = #tpu.dot_dimension_numbers<[1], [0], [0], [1], [0, 0, 1, 1], [], []>} : vector<16x128xbf16>, vector<128x384xbf16>, vector<16x384xf32> -> vector<16x384xf32>
    %c1 = arith.constant 1 : index
    %c0_5 = arith.constant 0 : index
    %c0_6 = arith.constant 0 : index
    %14 = vector.load %arg2[%c1, %c0_5, %c0_6] : memref<5x128x384xbf16, #tpu.memory_space<vmem>>, vector<1x128x384xbf16>
    %15 = vector.shape_cast %14 : vector<1x128x384xbf16> to vector<128x384xbf16>
    %cst_7 = arith.constant dense<0.000000e+00> : vector<16x384xf32>
    %16 = tpu.matmul %4, %15, %cst_7 {dimension_numbers = #tpu.dot_dimension_numbers<[1], [0], [0], [1], [0, 0, 1, 1], [], []>} : vector<16x128xbf16>, vector<128x384xbf16>, vector<16x384xf32> -> vector<16x384xf32>
    %17 = arith.addf %13, %16 : vector<16x384xf32>
    %c2 = arith.constant 2 : index
    %c0_8 = arith.constant 0 : index
    %c0_9 = arith.constant 0 : index
    %18 = vector.load %arg2[%c2, %c0_8, %c0_9] : memref<5x128x384xbf16, #tpu.memory_space<vmem>>, vector<1x128x384xbf16>
    %19 = vector.shape_cast %18 : vector<1x128x384xbf16> to vector<128x384xbf16>
    %cst_10 = arith.constant dense<0.000000e+00> : vector<16x384xf32>
    %20 = tpu.matmul %6, %19, %cst_10 {dimension_numbers = #tpu.dot_dimension_numbers<[1], [0], [0], [1], [0, 0, 1, 1], [], []>} : vector<16x128xbf16>, vector<128x384xbf16>, vector<16x384xf32> -> vector<16x384xf32>
    %21 = arith.addf %17, %20 : vector<16x384xf32>
    %c3 = arith.constant 3 : index
    %c0_11 = arith.constant 0 : index
    %c0_12 = arith.constant 0 : index
    %22 = vector.load %arg2[%c3, %c0_11, %c0_12] : memref<5x128x384xbf16, #tpu.memory_space<vmem>>, vector<1x128x384xbf16>
    %23 = vector.shape_cast %22 : vector<1x128x384xbf16> to vector<128x384xbf16>
    %24 = vector.extract_strided_slice %23 {offsets = [0, 128], sizes = [128, 256], strides = [1, 1]} : vector<128x384xbf16> to vector<128x256xbf16>
    %cst_13 = arith.constant dense<0.000000e+00> : vector<16x256xf32>
    %25 = tpu.matmul %8, %24, %cst_13 {dimension_numbers = #tpu.dot_dimension_numbers<[1], [0], [0], [1], [0, 0, 1, 1], [], []>} : vector<16x128xbf16>, vector<128x256xbf16>, vector<16x256xf32> -> vector<16x256xf32>
    %c4 = arith.constant 4 : index
    %c0_14 = arith.constant 0 : index
    %c0_15 = arith.constant 0 : index
    %26 = vector.load %arg2[%c4, %c0_14, %c0_15] : memref<5x128x384xbf16, #tpu.memory_space<vmem>>, vector<1x128x384xbf16>
    %27 = vector.shape_cast %26 : vector<1x128x384xbf16> to vector<128x384xbf16>
    %28 = vector.extract_strided_slice %27 {offsets = [0, 256], sizes = [128, 128], strides = [1, 1]} : vector<128x384xbf16> to vector<128x128xbf16>
    %cst_16 = arith.constant dense<0.000000e+00> : vector<16x128xf32>
    %29 = tpu.matmul %10, %28, %cst_16 {dimension_numbers = #tpu.dot_dimension_numbers<[1], [0], [0], [1], [0, 0, 1, 1], [], []>} : vector<16x128xbf16>, vector<128x128xbf16>, vector<16x128xf32> -> vector<16x128xf32>
    %30 = vector.extract_strided_slice %21 {offsets = [0, 0], sizes = [16, 128], strides = [1, 1]} : vector<16x384xf32> to vector<16x128xf32>
    %31 = vector.extract_strided_slice %21 {offsets = [0, 128], sizes = [16, 128], strides = [1, 1]} : vector<16x384xf32> to vector<16x128xf32>
    %32 = vector.extract_strided_slice %25 {offsets = [0, 0], sizes = [16, 128], strides = [1, 1]} : vector<16x256xf32> to vector<16x128xf32>
    %33 = arith.addf %31, %32 : vector<16x128xf32>
    %34 = vector.extract_strided_slice %21 {offsets = [0, 256], sizes = [16, 128], strides = [1, 1]} : vector<16x384xf32> to vector<16x128xf32>
    %35 = vector.extract_strided_slice %25 {offsets = [0, 128], sizes = [16, 128], strides = [1, 1]} : vector<16x256xf32> to vector<16x128xf32>
    %36 = arith.addf %34, %35 : vector<16x128xf32>
    %37 = arith.addf %36, %29 : vector<16x128xf32>
    %38 = vector.shape_cast %30 : vector<16x128xf32> to vector<2x8x128xf32>
    %39 = tpu.iota {dimensions = array<i32: 1>} : vector<2x8x128xi32>
    %c5_i32 = arith.constant 5 : i32
    %40 = vector.broadcast %c5_i32 : i32 to vector<2x8x128xi32>
    %41 = arith.cmpi sle, %39, %40 : vector<2x8x128xi32>
    %cst_17 = arith.constant 0xFF800000 : f32
    %42 = vector.broadcast %cst_17 : f32 to vector<2x8x128xf32>
    %43 = arith.select %41, %38, %42 : vector<2x8x128xi1>, vector<2x8x128xf32>
    %cst_18 = arith.constant dense<0xFF800000> : vector<2x128xf32>
    %44 = vector.multi_reduction <maximumf>, %43, %cst_18 [1] : vector<2x8x128xf32> to vector<2x128xf32>
    %45 = vector.shape_cast %33 : vector<16x128xf32> to vector<2x8x128xf32>
    %46 = tpu.iota {dimensions = array<i32: 1>} : vector<2x8x128xi32>
    %c4_i32 = arith.constant 4 : i32
    %47 = vector.broadcast %c4_i32 : i32 to vector<2x8x128xi32>
    %48 = arith.cmpi sle, %46, %47 : vector<2x8x128xi32>
    %cst_19 = arith.constant 0xFF800000 : f32
    %49 = vector.broadcast %cst_19 : f32 to vector<2x8x128xf32>
    %50 = arith.select %48, %45, %49 : vector<2x8x128xi1>, vector<2x8x128xf32>
    %cst_20 = arith.constant dense<0xFF800000> : vector<2x128xf32>
    %51 = vector.multi_reduction <maximumf>, %50, %cst_20 [1] : vector<2x8x128xf32> to vector<2x128xf32>
    %52 = vector.shape_cast %37 : vector<16x128xf32> to vector<2x8x128xf32>
    %53 = tpu.iota {dimensions = array<i32: 1>} : vector<2x8x128xi32>
    %c3_i32 = arith.constant 3 : i32
    %54 = vector.broadcast %c3_i32 : i32 to vector<2x8x128xi32>
    %55 = arith.cmpi sle, %53, %54 : vector<2x8x128xi32>
    %cst_21 = arith.constant 0xFF800000 : f32
    %56 = vector.broadcast %cst_21 : f32 to vector<2x8x128xf32>
    %57 = arith.select %55, %52, %56 : vector<2x8x128xi1>, vector<2x8x128xf32>
    %cst_22 = arith.constant dense<0xFF800000> : vector<2x128xf32>
    %58 = vector.multi_reduction <maximumf>, %57, %cst_22 [1] : vector<2x8x128xf32> to vector<2x128xf32>
    %59 = tpu.concatenate %44, %51, %58 in 1 : vector<2x128xf32>, vector<2x128xf32>, vector<2x128xf32> -> vector<2x384xf32>
    %c0_23 = arith.constant 0 : index
    %c0_24 = arith.constant 0 : index
    %60 = vector.load %arg3[%c0_23, %c0_24] : memref<1x384xf32, #tpu.memory_space<vmem>>, vector<1x384xf32>
    %61 = vector.broadcast %60 : vector<1x384xf32> to vector<2x384xf32>
    %62 = arith.addf %59, %61 : vector<2x384xf32>
    %cst_25 = arith.constant 0.000000e+00 : f32
    %63 = vector.broadcast %cst_25 : f32 to vector<2x384xf32>
    %64 = arith.maximumf %62, %63 : vector<2x384xf32>
    %c0_26 = arith.constant 0 : index
    %c0_27 = arith.constant 0 : index
    %65 = vector.load %arg4[%c0_26, %c0_27] : memref<384x128xf32, #tpu.memory_space<vmem>>, vector<384x128xf32>
    %cst_28 = arith.constant dense<0.000000e+00> : vector<2x128xf32>
    %66 = tpu.matmul %64, %65, %cst_28 {dimension_numbers = #tpu.dot_dimension_numbers<[1], [0], [0], [1], [0, 0, 1, 1], [], []>} : vector<2x384xf32>, vector<384x128xf32>, vector<2x128xf32> -> vector<2x128xf32>
    %c0_29 = arith.constant 0 : index
    %c0_30 = arith.constant 0 : index
    %67 = vector.load %arg5[%c0_29, %c0_30] : memref<1x128xf32, #tpu.memory_space<vmem>>, vector<1x128xf32>
    %68 = vector.broadcast %67 : vector<1x128xf32> to vector<2x128xf32>
    %69 = arith.addf %66, %68 : vector<2x128xf32>
    %c0_31 = arith.constant 0 : index
    %c0_32 = arith.constant 0 : index
    %70 = vector.load %arg6[%c0_31, %c0_32] : memref<2x128xf32, #tpu.memory_space<vmem>>, vector<2x128xf32>
    tpu.vector_store %arg6[%c0_31, %c0_32], %69 {strides = array<i32>} : memref<2x128xf32, #tpu.memory_space<vmem>>, vector<2x128xf32>,
    return
  }
  func.func @transform_0(%arg0: i32) -> (i32, i32, i32) {
    %c0_i32 = arith.constant 0 : i32
    %c0_i32_0 = arith.constant 0 : i32
    %c0_i32_1 = arith.constant 0 : i32
    return %arg0, %c0_i32, %c0_i32_0 : i32, i32, i32
  }
  func.func @transform_1(%arg0: i32) -> (i32, i32, i32) {
    %c0_i32 = arith.constant 0 : i32
    %c0_i32_0 = arith.constant 0 : i32
    %c0_i32_1 = arith.constant 0 : i32
    %c0_i32_2 = arith.constant 0 : i32
    return %c0_i32, %c0_i32_0, %c0_i32_1 : i32, i32, i32
  }
  func.func @transform_2(%arg0: i32) -> (i32, i32) {
    %c0_i32 = arith.constant 0 : i32
    %c0_i32_0 = arith.constant 0 : i32
    %c0_i32_1 = arith.constant 0 : i32
    return %c0_i32, %c0_i32_0 : i32, i32
  }
  func.func @transform_3(%arg0: i32) -> (i32, i32) {
    %c0_i32 = arith.constant 0 : i32
    %c0_i32_0 = arith.constant 0 : i32
    %c0_i32_1 = arith.constant 0 : i32
    return %c0_i32, %c0_i32_0 : i32, i32
  }
  func.func @transform_4(%arg0: i32) -> (i32, i32) {
    %c0_i32 = arith.constant 0 : i32
    %c0_i32_0 = arith.constant 0 : i32
    %c0_i32_1 = arith.constant 0 : i32
    return %c0_i32, %c0_i32_0 : i32, i32
  }
  func.func @transform_5(%arg0: i32) -> (i32, i32) {
    %c0_i32 = arith.constant 0 : i32
    %c0_i32_0 = arith.constant 0 : i32
    return %arg0, %c0_i32 : i32, i32
  }
}

</mosaic_0001>

<llo_original>
// kernel: liar_model_forward.1
$region0: #{liar_model_forward.1}
  #allocation0 [shape = 'u32[]', space=smem, size = 0x4, offset = 0x4, fixed_abs, tag = 'smem constant byte address 0x4 - core index']
  #allocation1 [shape = 'u32[144,128]{1,0:T(1,128)}', space=vmem, size = 0x12000, scoped, tag = 'internal scratch']
  %s0 = inlined_call_operand.vmem [shape: bf16[2,12,128], index: 0, kind: input, shape index: {}]
  %s1 = inlined_call_operand.hbm [shape: bf16[5,128,384], index: 1, kind: input, shape index: {}]
  %s2 = inlined_call_operand.hbm [shape: f32[1,384], index: 2, kind: input, shape index: {}]
  %s3 = inlined_call_operand.hbm [shape: f32[384,128], index: 3, kind: input, shape index: {}]
  %s4 = inlined_call_operand.hbm [shape: f32[1,128], index: 4, kind: input, shape index: {}]
  %s5 = inlined_call_operand.hbm [shape: f32[2,128], index: 5, kind: output, shape index: {}]
  %s6 = sld [smem:[#allocation0]]
  $region46: #{liar_model_forward.1} parent=0
    _
  %s8 = ssub.s32 1, %s6
  %s9 = scalar_select 0, %s8, %s6
  $region1: #{liar_model_forward.1} parent=0
    #allocation2 [shape = 'u8[491520]{0}', space=vmem, size = 0x78000, scoped, tag = 'input window, operand 1, single buffered']
    #allocation3 [shape = 's32[1]{0}', space=sflag, size = 0x4, scoped, tag = 'scoped memory for liar_model_forward.1']
    #allocation4 [shape = 's32[1]{0}', space=sflag, size = 0x4, scoped, tag = 'scoped memory for liar_model_forward.1']
    #allocation5 [shape = 'u8[1536]{0}', space=vmem, size = 0x800, scoped, tag = 'input window, operand 2, single buffered']
    #allocation6 [shape = 's32[1]{0}', space=sflag, size = 0x4, scoped, tag = 'scoped memory for liar_model_forward.1']
    #allocation7 [shape = 'u8[196608]{0}', space=vmem, size = 0x30000, scoped, tag = 'input window, operand 3, single buffered']
    #allocation8 [shape = 'u8[512]{0}', space=vmem, size = 0x400, scoped, tag = 'input window, operand 4, single buffered']
    #allocation9 [shape = 's32[1]{0}', space=sflag, size = 0x4, scoped, tag = 'scoped memory for liar_model_forward.1']
    #allocation10 [shape = 'u8[1024]{0}', space=vmem, size = 0x400, scoped, tag = 'output window, operand 0, single buffered']
    %10 = vsyncpa [#allocation3], 0
    %11 = vsyncpa [#allocation6], 0
    %12 = vsyncpa [#allocation9], 0
    %13 = vsyncpa [#allocation4], 0
    // Predicated region
    $region2: #{liar_model_forward.1} parent=1 // pred_check
      _
    $region3: #{liar_model_forward.1} parent=1 // pred_check_branch
      %15 = sbr.rel (0) target = $region5
    $region4: #{liar_model_forward.1} parent=1 // pred_region
      _
    $region5: #{liar_model_forward.1} parent=1 // pred_fallthru
      _
    // Predicated region
    $region6: #{liar_model_forward.1} parent=1 // pred_check
      _
    $region7: #{liar_model_forward.1} parent=1 // pred_check_branch
      %17 = sbr.rel (0) target = $region9
    $region8: #{liar_model_forward.1} parent=1 // pred_region
      %s19 = ssub.s32 15360, 15360
      %20 = vsyncadd [#allocation3], %s19
      %s21 = sshll.u32 [#allocation2], 4
      %s22 = int_to_ptr.vmem [resolvable:$true] %s21
      %27 = dma.hbm_to_vmem [thread:$0]  %s1, 15360, %s22, [#allocation3], 192, 192, 12
    $region9: #{liar_model_forward.1} parent=1 // pred_fallthru
      _
    // Predicated region
    $region10: #{liar_model_forward.1} parent=1 // pred_check
      _
    $region11: #{liar_model_forward.1} parent=1 // pred_check_branch
      %29 = sbr.rel (0) target = $region13
    $region12: #{liar_model_forward.1} parent=1 // pred_region
      %s31 = ssub.s32 48, 48
      %32 = vsyncadd [#allocation6], %s31
      %s34 = sshll.u32 [#allocation5], 4
      %s35 = int_to_ptr.vmem [resolvable:$true] %s34
      %37 = dma.hbm_to_vmem [thread:$0]  %s2, 48, %s35, [#allocation6]
    $region13: #{liar_model_forward.1} parent=1 // pred_fallthru
      _
    // Predicated region
    $region14: #{liar_model_forward.1} parent=1 // pred_check
      _
    $region15: #{liar_model_forward.1} parent=1 // pred_check_branch
      %39 = sbr.rel (0) target = $region17
    $region16: #{liar_model_forward.1} parent=1 // pred_region
      %s41 = ssub.s32 6144, 6144
      %42 = vsyncadd [#allocation6], %s41
      %s43 = sshll.u32 [#allocation7], 4
      %s44 = int_to_ptr.vmem [resolvable:$true] %s43
      %49 = dma.hbm_to_vmem [thread:$0]  %s3, 6144, %s44, [#allocation6], 128, 128, 8
    $region17: #{liar_model_forward.1} parent=1 // pred_fallthru
      _
    // Predicated region
    $region18: #{liar_model_forward.1} parent=1 // pred_check
      _
    $region19: #{liar_model_forward.1} parent=1 // pred_check_branch
      %51 = sbr.rel (0) target = $region21
    $region20: #{liar_model_forward.1} parent=1 // pred_region
      %s53 = ssub.s32 16, 16
      %54 = vsyncadd [#allocation9], %s53
      %s56 = sshll.u32 [#allocation8], 4
      %s57 = int_to_ptr.vmem [resolvable:$true] %s56
      %59 = dma.hbm_to_vmem [thread:$0]  %s4, 16, %s57, [#allocation9]
    $region21: #{liar_model_forward.1} parent=1 // pred_fallthru
      _
    // Predicated region
    $region22: #{liar_model_forward.1} parent=1 // pred_check
      _
    $region23: #{liar_model_forward.1} parent=1 // pred_check_branch
      %61 = sbr.rel (0) target = $region25
    $region24: #{liar_model_forward.1} parent=1 // pred_region
      %62 = dma.done [#allocation3], 15360
    $region25: #{liar_model_forward.1} parent=1 // pred_fallthru
      _
    // Predicated region
    $region26: #{liar_model_forward.1} parent=1 // pred_check
      _
    $region27: #{liar_model_forward.1} parent=1 // pred_check_branch
      %64 = sbr.rel (0) target = $region29
    $region28: #{liar_model_forward.1} parent=1 // pred_region
      %65 = dma.done [#allocation6], 48
    $region29: #{liar_model_forward.1} parent=1 // pred_fallthru
      _
    // Predicated region
    $region30: #{liar_model_forward.1} parent=1 // pred_check
      _
    $region31: #{liar_model_forward.1} parent=1 // pred_check_branch
      %67 = sbr.rel (0) target = $region33
    $region32: #{liar_model_forward.1} parent=1 // pred_region
      %68 = dma.done [#allocation6], 6144
    $region33: #{liar_model_forward.1} parent=1 // pred_fallthru
      _
    // Predicated region
    $region34: #{liar_model_forward.1} parent=1 // pred_check
      _
    $region35: #{liar_model_forward.1} parent=1 // pred_check_branch
      %70 = sbr.rel (0) target = $region37
    $region36: #{liar_model_forward.1} parent=1 // pred_region
      %71 = dma.done [#allocation9], 16
    $region37: #{liar_model_forward.1} parent=1 // pred_fallthru
      _
    %v73 = vld [vmem:[%s0] sm:$0xf]
    %v74 = vld [vmem:[%s0 + $0x4] sm:$0x3]
    %v75 = vld [vmem:[%s0 + $0x8] sm:$0xf]
    %v76 = vld [vmem:[%s0 + $0xc] sm:$0x3]
    %vm77 = vsmask.f32 3328
    %vm78 = vsmask.f32 7440
    %vm79 = vmor %vm77, %vm78
    %v81 = vshrl.u32 %v73, 16
    %v83 = vrot.slane %v81, 4
    %v84 = vshll.u32 %v73, 16
    %v86 = vrot.slane %v84, 5
    %v87 = vor.u32 %v83, %v86
    %v88 = vrot.slane %v87, 4
    %v90 = vshll.u32 %v74, 16
    %v92 = vrot.slane %v90, 5
    %v93 = vsel %vm79, %v88, %v92
    %v95 = vshrl.u32 %v75, 16
    %v97 = vrot.slane %v95, 4
    %v98 = vshll.u32 %v75, 16
    %v100 = vrot.slane %v98, 5
    %v101 = vor.u32 %v97, %v100
    %v102 = vrot.slane %v101, 4
    %v104 = vshll.u32 %v76, 16
    %v106 = vrot.slane %v104, 5
    %v107 = vsel %vm79, %v102, %v106
    %vm112 = vcmask 1042432
    %vm113 = vcmask 1046532
    %vm114 = vmor %vm112, %vm113
    %v115 = vrot.slane %v73, 5
    %v116 = vrot.slane %v115, 4
    %v117 = vrot.slane %v74, 5
    %v118 = vsel %vm114, %v116, %v117
    %v119 = vrot.slane %v75, 5
    %v120 = vrot.slane %v119, 4
    %v121 = vrot.slane %v76, 5
    %v122 = vsel %vm114, %v120, %v121
    %vm123 = vsmask.f32 2304
    %vm124 = vsmask.f32 6416
    %vm125 = vmor %vm123, %vm124
    %v126 = vrot.slane %v81, 5
    %v127 = vrot.slane %v84, 6
    %v128 = vor.u32 %v126, %v127
    %v129 = vrot.slane %v128, 4
    %v130 = vshrl.u32 %v74, 16
    %v132 = vrot.slane %v130, 5
    %v133 = vrot.slane %v90, 6
    %v134 = vor.u32 %v132, %v133
    %v135 = vsel %vm125, %v129, %v134
    %v136 = vrot.slane %v95, 5
    %v137 = vrot.slane %v98, 6
    %v138 = vor.u32 %v136, %v137
    %v139 = vrot.slane %v138, 4
    %v140 = vshrl.u32 %v76, 16
    %v142 = vrot.slane %v140, 5
    %v143 = vrot.slane %v104, 6
    %v144 = vor.u32 %v142, %v143
    %v145 = vsel %vm125, %v139, %v144
    %vm146 = vcmask 1041408
    %vm147 = vcmask 1045508
    %vm148 = vmor %vm146, %vm147
    %v149 = vrot.slane %v73, 6
    %v150 = vrot.slane %v149, 4
    %v151 = vrot.slane %v74, 6
    %v152 = vsel %vm148, %v150, %v151
    %v153 = vrot.slane %v75, 6
    %v154 = vrot.slane %v153, 4
    %v155 = vrot.slane %v76, 6
    %v156 = vsel %vm148, %v154, %v155
    %v157 = vld [vmem:[#allocation2] sm:$0xff]
    %v158 = vld [vmem:[#allocation2 + $0x8] sm:$0xf]
    %v159 = vld [vmem:[#allocation2 + $0xc] sm:$0xff]
    %v160 = vld [vmem:[#allocation2 + $0x14] sm:$0xf]
    %v161 = vld [vmem:[#allocation2 + $0x18] sm:$0xff]
    %v162 = vld [vmem:[#allocation2 + $0x20] sm:$0xf]
    %v163 = vld [vmem:[#allocation2 + $0x24] sm:$0xff]
    %v164 = vld [vmem:[#allocation2 + $0x2c] sm:$0xf]
    %v165 = vld [vmem:[#allocation2 + $0x30] sm:$0xff]
    %v166 = vld [vmem:[#allocation2 + $0x38] sm:$0xf]
    %v167 = vld [vmem:[#allocation2 + $0x3c] sm:$0xff]
    %v168 = vld [vmem:[#allocation2 + $0x44] sm:$0xf]
    %v169 = vld [vmem:[#allocation2 + $0x48] sm:$0xff]
    %v170 = vld [vmem:[#allocation2 + $0x50] sm:$0xf]
    %v171 = vld [vmem:[#allocation2 + $0x54] sm:$0xff]
    %v172 = vld [vmem:[#allocation2 + $0x5c] sm:$0xf]
    %v173 = vld [vmem:[#allocation2 + $0x60] sm:$0xff]
    %v174 = vld [vmem:[#allocation2 + $0x68] sm:$0xf]
    %v175 = vld [vmem:[#allocation2 + $0x6c] sm:$0xff]
    %v176 = vld [vmem:[#allocation2 + $0x74] sm:$0xf]
    %v177 = vld [vmem:[#allocation2 + $0x78] sm:$0xff]
    %v178 = vld [vmem:[#allocation2 + $0x80] sm:$0xf]
    %v179 = vld [vmem:[#allocation2 + $0x84] sm:$0xff]
    %v180 = vld [vmem:[#allocation2 + $0x8c] sm:$0xf]
    %v181 = vld [vmem:[#allocation2 + $0x90] sm:$0xff]
    %v182 = vld [vmem:[#allocation2 + $0x98] sm:$0xf]
    %v183 = vld [vmem:[#allocation2 + $0x9c] sm:$0xff]
    %v184 = vld [vmem:[#allocation2 + $0xa4] sm:$0xf]
    %v185 = vld [vmem:[#allocation2 + $0xa8] sm:$0xff]
    %v186 = vld [vmem:[#allocation2 + $0xb0] sm:$0xf]
    %v187 = vld [vmem:[#allocation2 + $0xb4] sm:$0xff]
    %v188 = vld [vmem:[#allocation2 + $0xbc] sm:$0xf]
    %s189 = scalar_lea.vmem [#allocation2], 192
    %v190 = vld [vmem:[%s189] sm:$0xff]
    %v191 = vld [vmem:[%s189 + $0x8] sm:$0xf]
    %v192 = vld [vmem:[%s189 + $0xc] sm:$0xff]
    %v193 = vld [vmem:[%s189 + $0x14] sm:$0xf]
    %v194 = vld [vmem:[%s189 + $0x18] sm:$0xff]
    %v195 = vld [vmem:[%s189 + $0x20] sm:$0xf]
    %v196 = vld [vmem:[%s189 + $0x24] sm:$0xff]
    %v197 = vld [vmem:[%s189 + $0x2c] sm:$0xf]
    %v198 = vld [vmem:[%s189 + $0x30] sm:$0xff]
    %v199 = vld [vmem:[%s189 + $0x38] sm:$0xf]
    %v200 = vld [vmem:[%s189 + $0x3c] sm:$0xff]
    %v201 = vld [vmem:[%s189 + $0x44] sm:$0xf]
    %v202 = vld [vmem:[%s189 + $0x48] sm:$0xff]
    %v203 = vld [vmem:[%s189 + $0x50] sm:$0xf]
    %v204 = vld [vmem:[%s189 + $0x54] sm:$0xff]
    %v205 = vld [vmem:[%s189 + $0x5c] sm:$0xf]
    %v206 = vld [vmem:[%s189 + $0x60] sm:$0xff]
    %v207 = vld [vmem:[%s189 + $0x68] sm:$0xf]
    %v208 = vld [vmem:[%s189 + $0x6c] sm:$0xff]
    %v209 = vld [vmem:[%s189 + $0x74] sm:$0xf]
    %v210 = vld [vmem:[%s189 + $0x78] sm:$0xff]
    %v211 = vld [vmem:[%s189 + $0x80] sm:$0xf]
    %v212 = vld [vmem:[%s189 + $0x84] sm:$0xff]
    %v213 = vld [vmem:[%s189 + $0x8c] sm:$0xf]
    %v214 = vld [vmem:[%s189 + $0x90] sm:$0xff]
    %v215 = vld [vmem:[%s189 + $0x98] sm:$0xf]
    %v216 = vld [vmem:[%s189 + $0x9c] sm:$0xff]
    %v217 = vld [vmem:[%s189 + $0xa4] sm:$0xf]
    %v218 = vld [vmem:[%s189 + $0xa8] sm:$0xff]
    %v219 = vld [vmem:[%s189 + $0xb0] sm:$0xf]
    %v220 = vld [vmem:[%s189 + $0xb4] sm:$0xff]
    %v221 = vld [vmem:[%s189 + $0xbc] sm:$0xf]
    %v222 = vunpack.c.l.b16 %v93
    %v223 = vunpack.c.l.b16 %v107
    %v224 = vpack.c.b16 %v223, %v222
    %v258 = vunpack.c.l.b16 %v190
    %v259 = vunpack.c.h.b16 %v190
    %v260 = vunpack.c.l.b16 %v191
    %v261 = vunpack.c.l.b16 %v192
    %v262 = vunpack.c.h.b16 %v192
    %v263 = vunpack.c.l.b16 %v193
    %v264 = vunpack.c.l.b16 %v194
    %v265 = vunpack.c.h.b16 %v194
    %v266 = vunpack.c.l.b16 %v195
    %v267 = vunpack.c.l.b16 %v196
    %v268 = vunpack.c.h.b16 %v196
    %v269 = vunpack.c.l.b16 %v197
    %v270 = vunpack.c.l.b16 %v198
    %v271 = vunpack.c.h.b16 %v198
    %v272 = vunpack.c.l.b16 %v199
    %v273 = vunpack.c.l.b16 %v200
    %v274 = vunpack.c.h.b16 %v200
    %v275 = vunpack.c.l.b16 %v201
    %v276 = vunpack.c.l.b16 %v202
    %v277 = vunpack.c.h.b16 %v202
    %v278 = vunpack.c.l.b16 %v203
    %v279 = vunpack.c.l.b16 %v204
    %v280 = vunpack.c.h.b16 %v204
    %v281 = vunpack.c.l.b16 %v205
    %v282 = vunpack.c.l.b16 %v206
    %v283 = vunpack.c.h.b16 %v206
    %v284 = vunpack.c.l.b16 %v207
    %v285 = vunpack.c.l.b16 %v208
    %v286 = vunpack.c.h.b16 %v208
    %v287 = vunpack.c.l.b16 %v209
    %v288 = vunpack.c.l.b16 %v210
    %v289 = vunpack.c.h.b16 %v210
    %v290 = vunpack.c.l.b16 %v211
    %v291 = vunpack.c.l.b16 %v212
    %v292 = vunpack.c.h.b16 %v212
    %v293 = vunpack.c.l.b16 %v213
    %v294 = vunpack.c.l.b16 %v214
    %v295 = vunpack.c.h.b16 %v214
    %v296 = vunpack.c.l.b16 %v215
    %v297 = vunpack.c.l.b16 %v216
    %v298 = vunpack.c.h.b16 %v216
    %v299 = vunpack.c.l.b16 %v217
    %v300 = vunpack.c.l.b16 %v218
    %v301 = vunpack.c.h.b16 %v218
    %v302 = vunpack.c.l.b16 %v219
    %v303 = vunpack.c.l.b16 %v220
    %v304 = vunpack.c.h.b16 %v220
    %v305 = vunpack.c.l.b16 %v221
    %v306 = vpack.c.b16 %v261, %v258
    %v307 = vpack.c.b16 %v262, %v259
    %v308 = vpack.c.b16 %v263, %v260
    %v309 = vpack.c.b16 %v267, %v264
    %v310 = vpack.c.b16 %v268, %v265
    %v311 = vpack.c.b16 %v269, %v266
    %v312 = vpack.c.b16 %v273, %v270
    %v313 = vpack.c.b16 %v274, %v271
    %v314 = vpack.c.b16 %v275, %v272
    %v315 = vpack.c.b16 %v279, %v276
    %v316 = vpack.c.b16 %v280, %v277
    %v317 = vpack.c.b16 %v281, %v278
    %v318 = vpack.c.b16 %v285, %v282
    %v319 = vpack.c.b16 %v286, %v283
    %v320 = vpack.c.b16 %v287, %v284
    %v321 = vpack.c.b16 %v291, %v288
    %v322 = vpack.c.b16 %v292, %v289
    %v323 = vpack.c.b16 %v293, %v290
    %v324 = vpack.c.b16 %v297, %v294
    %v325 = vpack.c.b16 %v298, %v295
    %v326 = vpack.c.b16 %v299, %v296
    %v327 = vpack.c.b16 %v303, %v300
    %v328 = vpack.c.b16 %v304, %v301
    %v329 = vpack.c.b16 %v305, %v302
    %354 = vmatprep.subr.bf16.mxu0 %v307
    %355 = vmatpush1.bf16.msra.mxu0 %v306
    %356 = vmatprep.subr.bf16.mxu0 %v310
    %357 = vmatpush1.bf16.msra.mxu0 %v309
    %358 = vmatprep.subr.bf16.mxu0 %v313
    %359 = vmatpush1.bf16.msra.mxu0 %v312
    %360 = vmatprep.subr.bf16.mxu0 %v316
    %361 = vmatpush1.bf16.msra.mxu0 %v315
    %362 = vmatprep.subr.bf16.mxu0 %v319
    %363 = vmatpush1.bf16.msra.mxu0 %v318
    %364 = vmatprep.subr.bf16.mxu0 %v322
    %365 = vmatpush1.bf16.msra.mxu0 %v321
    %366 = vmatprep.subr.bf16.mxu0 %v325
    %367 = vmatpush1.bf16.msra.mxu0 %v324
    %368 = vmatprep.subr.bf16.mxu0 %v328
    %369 = vmatpush1.bf16.msra.mxu0 %v327
    %370 = vmatprep.subr.bf16.mxu0 0
    %371 = vmatpush1.bf16.msra.mxu0 0
    %372 = vmatprep.subr.bf16.mxu0 0
    %373 = vmatpush1.bf16.msra.mxu0 0
    %374 = vmatprep.subr.bf16.mxu0 0
    %375 = vmatpush1.bf16.msra.mxu0 0
    %376 = vmatprep.subr.bf16.mxu0 0
    %377 = vmatpush1.bf16.msra.mxu0 0
    %378 = vmatprep.subr.bf16.mxu0 0
    %379 = vmatpush1.bf16.msra.mxu0 0
    %380 = vmatprep.subr.bf16.mxu0 0
    %381 = vmatpush1.bf16.msra.mxu0 0
    %382 = vmatprep.subr.bf16.mxu0 0
    %383 = vmatpush1.bf16.msra.mxu0 0
    %384 = vmatprep.subr.bf16.mxu0 0
    %385 = vmatpush1.bf16.msra.mxu0 0
    %386 = vmatprep.mubr.bf16.mxu0 0
    %387 = vmatmul.mubr.bf16.gmra.mrb[0].mxu0 %v224
    %v388 = vpop.f32.mrb[0].mxu0
    %v389 = vadd.f32 0.0, %v388
    %v390 = vpop.f32.mrb[0].mxu0
    %v391 = vadd.f32 0.0, %v390
    %v392 = vpop.f32.mrb[0].mxu0
    %v393 = vadd.f32 0.0, %v392
    %v394 = vpop.f32.mrb[0].mxu0
    %v395 = vadd.f32 0.0, %v394
    %396 = vdwg.mxu0
    %397 = vmatprep.subr.bf16.mxu0 0
    %398 = vmatpush1.bf16.msra.mxu0 %v308
    %399 = vmatprep.subr.bf16.mxu0 0
    %400 = vmatpush1.bf16.msra.mxu0 %v311
    %401 = vmatprep.subr.bf16.mxu0 0
    %402 = vmatpush1.bf16.msra.mxu0 %v314
    %403 = vmatprep.subr.bf16.mxu0 0
    %404 = vmatpush1.bf16.msra.mxu0 %v317
    %405 = vmatprep.subr.bf16.mxu0 0
    %406 = vmatpush1.bf16.msra.mxu0 %v320
    %407 = vmatprep.subr.bf16.mxu0 0
    %408 = vmatpush1.bf16.msra.mxu0 %v323
    %409 = vmatprep.subr.bf16.mxu0 0
    %410 = vmatpush1.bf16.msra.mxu0 %v326
    %411 = vmatprep.subr.bf16.mxu0 0
    %412 = vmatpush1.bf16.msra.mxu0 %v329
    %413 = vmatprep.subr.bf16.mxu0 0
    %414 = vmatpush1.bf16.msra.mxu0 0
    %415 = vmatprep.subr.bf16.mxu0 0
    %416 = vmatpush1.bf16.msra.mxu0 0
    %417 = vmatprep.subr.bf16.mxu0 0
    %418 = vmatpush1.bf16.msra.mxu0 0
    %419 = vmatprep.subr.bf16.mxu0 0
    %420 = vmatpush1.bf16.msra.mxu0 0
    %421 = vmatprep.subr.bf16.mxu0 0
    %422 = vmatpush1.bf16.msra.mxu0 0
    %423 = vmatprep.subr.bf16.mxu0 0
    %424 = vmatpush1.bf16.msra.mxu0 0
    %425 = vmatprep.subr.bf16.mxu0 0
    %426 = vmatpush1.bf16.msra.mxu0 0
    %427 = vmatprep.subr.bf16.mxu0 0
    %428 = vmatpush1.bf16.msra.mxu0 0
    %429 = vmatprep.mubr.bf16.mxu0 0
    %430 = vmatmul.mubr.bf16.gmra.mrb[0].mxu0 %v224
    %v431 = vpop.f32.mrb[0].mxu0
    %v432 = vadd.f32 0.0, %v431
    %v433 = vpop.f32.mrb[0].mxu0
    %v434 = vpop.f32.mrb[0].mxu0
    %v435 = vadd.f32 0.0, %v434
    %v436 = vpop.f32.mrb[0].mxu0
    %437 = vdwg.mxu0
    %v438 = vunpack.c.l.b16 %v73
    %v439 = vunpack.c.l.b16 %v75
    %v440 = vpack.c.b16 %v439, %v438
    %v474 = vunpack.c.l.b16 %v157
    %v475 = vunpack.c.h.b16 %v157
    %v476 = vunpack.c.l.b16 %v158
    %v477 = vunpack.c.l.b16 %v159
    %v478 = vunpack.c.h.b16 %v159
    %v479 = vunpack.c.l.b16 %v160
    %v480 = vunpack.c.l.b16 %v161
    %v481 = vunpack.c.h.b16 %v161
    %v482 = vunpack.c.l.b16 %v162
    %v483 = vunpack.c.l.b16 %v163
    %v484 = vunpack.c.h.b16 %v163
    %v485 = vunpack.c.l.b16 %v164
    %v486 = vunpack.c.l.b16 %v165
    %v487 = vunpack.c.h.b16 %v165
    %v488 = vunpack.c.l.b16 %v166
    %v489 = vunpack.c.l.b16 %v167
    %v490 = vunpack.c.h.b16 %v167
    %v491 = vunpack.c.l.b16 %v168
    %v492 = vunpack.c.l.b16 %v169
    %v493 = vunpack.c.h.b16 %v169
    %v494 = vunpack.c.l.b16 %v170
    %v495 = vunpack.c.l.b16 %v171
    %v496 = vunpack.c.h.b16 %v171
    %v497 = vunpack.c.l.b16 %v172
    %v498 = vunpack.c.l.b16 %v173
    %v499 = vunpack.c.h.b16 %v173
    %v500 = vunpack.c.l.b16 %v174
    %v501 = vunpack.c.l.b16 %v175
    %v502 = vunpack.c.h.b16 %v175
    %v503 = vunpack.c.l.b16 %v176
    %v504 = vunpack.c.l.b16 %v177
    %v505 = vunpack.c.h.b16 %v177
    %v506 = vunpack.c.l.b16 %v178
    %v507 = vunpack.c.l.b16 %v179
    %v508 = vunpack.c.h.b16 %v179
    %v509 = vunpack.c.l.b16 %v180
    %v510 = vunpack.c.l.b16 %v181
    %v511 = vunpack.c.h.b16 %v181
    %v512 = vunpack.c.l.b16 %v182
    %v513 = vunpack.c.l.b16 %v183
    %v514 = vunpack.c.h.b16 %v183
    %v515 = vunpack.c.l.b16 %v184
    %v516 = vunpack.c.l.b16 %v185
    %v517 = vunpack.c.h.b16 %v185
    %v518 = vunpack.c.l.b16 %v186
    %v519 = vunpack.c.l.b16 %v187
    %v520 = vunpack.c.h.b16 %v187
    %v521 = vunpack.c.l.b16 %v188
    %v522 = vpack.c.b16 %v477, %v474
    %v523 = vpack.c.b16 %v478, %v475
    %v524 = vpack.c.b16 %v479, %v476
    %v525 = vpack.c.b16 %v483, %v480
    %v526 = vpack.c.b16 %v484, %v481
    %v527 = vpack.c.b16 %v485, %v482
    %v528 = vpack.c.b16 %v489, %v486
    %v529 = vpack.c.b16 %v490, %v487
    %v530 = vpack.c.b16 %v491, %v488
    %v531 = vpack.c.b16 %v495, %v492
    %v532 = vpack.c.b16 %v496, %v493
    %v533 = vpack.c.b16 %v497, %v494
    %v534 = vpack.c.b16 %v501, %v498
    %v535 = vpack.c.b16 %v502, %v499
    %v536 = vpack.c.b16 %v503, %v500
    %v537 = vpack.c.b16 %v507, %v504
    %v538 = vpack.c.b16 %v508, %v505
    %v539 = vpack.c.b16 %v509, %v506
    %v540 = vpack.c.b16 %v513, %v510
    %v541 = vpack.c.b16 %v514, %v511
    %v542 = vpack.c.b16 %v515, %v512
    %v543 = vpack.c.b16 %v519, %v516
    %v544 = vpack.c.b16 %v520, %v517
    %v545 = vpack.c.b16 %v521, %v518
    %570 = vmatprep.subr.bf16.mxu0 %v523
    %571 = vmatpush1.bf16.msra.mxu0 %v522
    %572 = vmatprep.subr.bf16.mxu0 %v526
    %573 = vmatpush1.bf16.msra.mxu0 %v525
    %574 = vmatprep.subr.bf16.mxu0 %v529
    %575 = vmatpush1.bf16.msra.mxu0 %v528
    %576 = vmatprep.subr.bf16.mxu0 %v532
    %577 = vmatpush1.bf16.msra.mxu0 %v531
    %578 = vmatprep.subr.bf16.mxu0 %v535
    %579 = vmatpush1.bf16.msra.mxu0 %v534
    %580 = vmatprep.subr.bf16.mxu0 %v538
    %581 = vmatpush1.bf16.msra.mxu0 %v537
    %582 = vmatprep.subr.bf16.mxu0 %v541
    %583 = vmatpush1.bf16.msra.mxu0 %v540
    %584 = vmatprep.subr.bf16.mxu0 %v544
    %585 = vmatpush1.bf16.msra.mxu0 %v543
    %586 = vmatprep.subr.bf16.mxu0 0
    %587 = vmatpush1.bf16.msra.mxu0 0
    %588 = vmatprep.subr.bf16.mxu0 0
    %589 = vmatpush1.bf16.msra.mxu0 0
    %590 = vmatprep.subr.bf16.mxu0 0
    %591 = vmatpush1.bf16.msra.mxu0 0
    %592 = vmatprep.subr.bf16.mxu0 0
    %593 = vmatpush1.bf16.msra.mxu0 0
    %594 = vmatprep.subr.bf16.mxu0 0
    %595 = vmatpush1.bf16.msra.mxu0 0
    %596 = vmatprep.subr.bf16.mxu0 0
    %597 = vmatpush1.bf16.msra.mxu0 0
    %598 = vmatprep.subr.bf16.mxu0 0
    %599 = vmatpush1.bf16.msra.mxu0 0
    %600 = vmatprep.subr.bf16.mxu0 0
    %601 = vmatpush1.bf16.msra.mxu0 0
    %602 = vmatprep.mubr.bf16.mxu0 0
    %603 = vmatmul.mubr.bf16.gmra.mrb[0].mxu0 %v440
    %v604 = vpop.f32.mrb[0].mxu0
    %v605 = vadd.f32 %v389, %v604
    %v606 = vpop.f32.mrb[0].mxu0
    %v607 = vadd.f32 %v391, %v606
    %v608 = vpop.f32.mrb[0].mxu0
    %v609 = vadd.f32 %v393, %v608
    %v610 = vpop.f32.mrb[0].mxu0
    %v611 = vadd.f32 %v395, %v610
    %612 = vdwg.mxu0
    %613 = vmatprep.subr.bf16.mxu0 0
    %614 = vmatpush1.bf16.msra.mxu0 %v524
    %615 = vmatprep.subr.bf16.mxu0 0
    %616 = vmatpush1.bf16.msra.mxu0 %v527
    %617 = vmatprep.subr.bf16.mxu0 0
    %618 = vmatpush1.bf16.msra.mxu0 %v530
    %619 = vmatprep.subr.bf16.mxu0 0
    %620 = vmatpush1.bf16.msra.mxu0 %v533
    %621 = vmatprep.subr.bf16.mxu0 0
    %622 = vmatpush1.bf16.msra.mxu0 %v536
    %623 = vmatprep.subr.bf16.mxu0 0
    %624 = vmatpush1.bf16.msra.mxu0 %v539
    %625 = vmatprep.subr.bf16.mxu0 0
    %626 = vmatpush1.bf16.msra.mxu0 %v542
    %627 = vmatprep.subr.bf16.mxu0 0
    %628 = vmatpush1.bf16.msra.mxu0 %v545
    %629 = vmatprep.subr.bf16.mxu0 0
    %630 = vmatpush1.bf16.msra.mxu0 0
    %631 = vmatprep.subr.bf16.mxu0 0
    %632 = vmatpush1.bf16.msra.mxu0 0
    %633 = vmatprep.subr.bf16.mxu0 0
    %634 = vmatpush1.bf16.msra.mxu0 0
    %635 = vmatprep.subr.bf16.mxu0 0
    %636 = vmatpush1.bf16.msra.mxu0 0
    %637 = vmatprep.subr.bf16.mxu0 0
    %638 = vmatpush1.bf16.msra.mxu0 0
    %639 = vmatprep.subr.bf16.mxu0 0
    %640 = vmatpush1.bf16.msra.mxu0 0
    %641 = vmatprep.subr.bf16.mxu0 0
    %642 = vmatpush1.bf16.msra.mxu0 0
    %643 = vmatprep.subr.bf16.mxu0 0
    %644 = vmatpush1.bf16.msra.mxu0 0
    %645 = vmatprep.mubr.bf16.mxu0 0
    %646 = vmatmul.mubr.bf16.gmra.mrb[0].mxu0 %v440
    %v647 = vpop.f32.mrb[0].mxu0
    %v648 = vadd.f32 %v432, %v647
    %v649 = vpop.f32.mrb[0].mxu0
    %v650 = vpop.f32.mrb[0].mxu0
    %v651 = vadd.f32 %v435, %v650
    %v652 = vpop.f32.mrb[0].mxu0
    %653 = vdwg.mxu0
    %s654 = scalar_lea.vmem [#allocation2], 384
    %v655 = vld [vmem:[%s654] sm:$0xff]
    %v656 = vld [vmem:[%s654 + $0x8] sm:$0xf]
    %v657 = vld [vmem:[%s654 + $0xc] sm:$0xff]
    %v658 = vld [vmem:[%s654 + $0x14] sm:$0xf]
    %v659 = vld [vmem:[%s654 + $0x18] sm:$0xff]
    %v660 = vld [vmem:[%s654 + $0x20] sm:$0xf]
    %v661 = vld [vmem:[%s654 + $0x24] sm:$0xff]
    %v662 = vld [vmem:[%s654 + $0x2c] sm:$0xf]
    %v663 = vld [vmem:[%s654 + $0x30] sm:$0xff]
    %v664 = vld [vmem:[%s654 + $0x38] sm:$0xf]
    %v665 = vld [vmem:[%s654 + $0x3c] sm:$0xff]
    %v666 = vld [vmem:[%s654 + $0x44] sm:$0xf]
    %v667 = vld [vmem:[%s654 + $0x48] sm:$0xff]
    %v668 = vld [vmem:[%s654 + $0x50] sm:$0xf]
    %v669 = vld [vmem:[%s654 + $0x54] sm:$0xff]
    %v670 = vld [vmem:[%s654 + $0x5c] sm:$0xf]
    %v671 = vld [vmem:[%s654 + $0x60] sm:$0xff]
    %v672 = vld [vmem:[%s654 + $0x68] sm:$0xf]
    %v673 = vld [vmem:[%s654 + $0x6c] sm:$0xff]
    %v674 = vld [vmem:[%s654 + $0x74] sm:$0xf]
    %v675 = vld [vmem:[%s654 + $0x78] sm:$0xff]
    %v676 = vld [vmem:[%s654 + $0x80] sm:$0xf]
    %v677 = vld [vmem:[%s654 + $0x84] sm:$0xff]
    %v678 = vld [vmem:[%s654 + $0x8c] sm:$0xf]
    %v679 = vld [vmem:[%s654 + $0x90] sm:$0xff]
    %v680 = vld [vmem:[%s654 + $0x98] sm:$0xf]
    %v681 = vld [vmem:[%s654 + $0x9c] sm:$0xff]
    %v682 = vld [vmem:[%s654 + $0xa4] sm:$0xf]
    %v683 = vld [vmem:[%s654 + $0xa8] sm:$0xff]
    %v684 = vld [vmem:[%s654 + $0xb0] sm:$0xf]
    %v685 = vld [vmem:[%s654 + $0xb4] sm:$0xff]
    %v686 = vld [vmem:[%s654 + $0xbc] sm:$0xf]
    %v687 = vunpack.c.l.b16 %v118
    %v688 = vunpack.c.l.b16 %v122
    %v689 = vpack.c.b16 %v688, %v687
    %v723 = vunpack.c.l.b16 %v655
    %v724 = vunpack.c.h.b16 %v655
    %v725 = vunpack.c.l.b16 %v656
    %v726 = vunpack.c.l.b16 %v657
    %v727 = vunpack.c.h.b16 %v657
    %v728 = vunpack.c.l.b16 %v658
    %v729 = vunpack.c.l.b16 %v659
    %v730 = vunpack.c.h.b16 %v659
    %v731 = vunpack.c.l.b16 %v660
    %v732 = vunpack.c.l.b16 %v661
    %v733 = vunpack.c.h.b16 %v661
    %v734 = vunpack.c.l.b16 %v662
    %v735 = vunpack.c.l.b16 %v663
    %v736 = vunpack.c.h.b16 %v663
    %v737 = vunpack.c.l.b16 %v664
    %v738 = vunpack.c.l.b16 %v665
    %v739 = vunpack.c.h.b16 %v665
    %v740 = vunpack.c.l.b16 %v666
    %v741 = vunpack.c.l.b16 %v667
    %v742 = vunpack.c.h.b16 %v667
    %v743 = vunpack.c.l.b16 %v668
    %v744 = vunpack.c.l.b16 %v669
    %v745 = vunpack.c.h.b16 %v669
    %v746 = vunpack.c.l.b16 %v670
    %v747 = vunpack.c.l.b16 %v671
    %v748 = vunpack.c.h.b16 %v671
    %v749 = vunpack.c.l.b16 %v672
    %v750 = vunpack.c.l.b16 %v673
    %v751 = vunpack.c.h.b16 %v673
    %v752 = vunpack.c.l.b16 %v674
    %v753 = vunpack.c.l.b16 %v675
    %v754 = vunpack.c.h.b16 %v675
    %v755 = vunpack.c.l.b16 %v676
    %v756 = vunpack.c.l.b16 %v677
    %v757 = vunpack.c.h.b16 %v677
    %v758 = vunpack.c.l.b16 %v678
    %v759 = vunpack.c.l.b16 %v679
    %v760 = vunpack.c.h.b16 %v679
    %v761 = vunpack.c.l.b16 %v680
    %v762 = vunpack.c.l.b16 %v681
    %v763 = vunpack.c.h.b16 %v681
    %v764 = vunpack.c.l.b16 %v682
    %v765 = vunpack.c.l.b16 %v683
    %v766 = vunpack.c.h.b16 %v683
    %v767 = vunpack.c.l.b16 %v684
    %v768 = vunpack.c.l.b16 %v685
    %v769 = vunpack.c.h.b16 %v685
    %v770 = vunpack.c.l.b16 %v686
    %v771 = vpack.c.b16 %v726, %v723
    %v772 = vpack.c.b16 %v727, %v724
    %v773 = vpack.c.b16 %v728, %v725
    %v774 = vpack.c.b16 %v732, %v729
    %v775 = vpack.c.b16 %v733, %v730
    %v776 = vpack.c.b16 %v734, %v731
    %v777 = vpack.c.b16 %v738, %v735
    %v778 = vpack.c.b16 %v739, %v736
    %v779 = vpack.c.b16 %v740, %v737
    %v780 = vpack.c.b16 %v744, %v741
    %v781 = vpack.c.b16 %v745, %v742
    %v782 = vpack.c.b16 %v746, %v743
    %v783 = vpack.c.b16 %v750, %v747
    %v784 = vpack.c.b16 %v751, %v748
    %v785 = vpack.c.b16 %v752, %v749
    %v786 = vpack.c.b16 %v756, %v753
    %v787 = vpack.c.b16 %v757, %v754
    %v788 = vpack.c.b16 %v758, %v755
    %v789 = vpack.c.b16 %v762, %v759
    %v790 = vpack.c.b16 %v763, %v760
    %v791 = vpack.c.b16 %v764, %v761
    %v792 = vpack.c.b16 %v768, %v765
    %v793 = vpack.c.b16 %v769, %v766
    %v794 = vpack.c.b16 %v770, %v767
    %819 = vmatprep.subr.bf16.mxu0 %v772
    %820 = vmatpush1.bf16.msra.mxu0 %v771
    %821 = vmatprep.subr.bf16.mxu0 %v775
    %822 = vmatpush1.bf16.msra.mxu0 %v774
    %823 = vmatprep.subr.bf16.mxu0 %v778
    %824 = vmatpush1.bf16.msra.mxu0 %v777
    %825 = vmatprep.subr.bf16.mxu0 %v781
    %826 = vmatpush1.bf16.msra.mxu0 %v780
    %827 = vmatprep.subr.bf16.mxu0 %v784
    %828 = vmatpush1.bf16.msra.mxu0 %v783
    %829 = vmatprep.subr.bf16.mxu0 %v787
    %830 = vmatpush1.bf16.msra.mxu0 %v786
    %831 = vmatprep.subr.bf16.mxu0 %v790
    %832 = vmatpush1.bf16.msra.mxu0 %v789
    %833 = vmatprep.subr.bf16.mxu0 %v793
    %834 = vmatpush1.bf16.msra.mxu0 %v792
    %835 = vmatprep.subr.bf16.mxu0 0
    %836 = vmatpush1.bf16.msra.mxu0 0
    %837 = vmatprep.subr.bf16.mxu0 0
    %838 = vmatpush1.bf16.msra.mxu0 0
    %839 = vmatprep.subr.bf16.mxu0 0
    %840 = vmatpush1.bf16.msra.mxu0 0
    %841 = vmatprep.subr.bf16.mxu0 0
    %842 = vmatpush1.bf16.msra.mxu0 0
    %843 = vmatprep.subr.bf16.mxu0 0
    %844 = vmatpush1.bf16.msra.mxu0 0
    %845 = vmatprep.subr.bf16.mxu0 0
    %846 = vmatpush1.bf16.msra.mxu0 0
    %847 = vmatprep.subr.bf16.mxu0 0
    %848 = vmatpush1.bf16.msra.mxu0 0
    %849 = vmatprep.subr.bf16.mxu0 0
    %850 = vmatpush1.bf16.msra.mxu0 0
    %851 = vmatprep.mubr.bf16.mxu0 0
    %852 = vmatmul.mubr.bf16.gmra.mrb[0].mxu0 %v689
    %v853 = vpop.f32.mrb[0].mxu0
    %v854 = vadd.f32 0.0, %v853
    %v855 = vpop.f32.mrb[0].mxu0
    %v856 = vadd.f32 0.0, %v855
    %v857 = vpop.f32.mrb[0].mxu0
    %v858 = vadd.f32 0.0, %v857
    %v859 = vpop.f32.mrb[0].mxu0
    %v860 = vadd.f32 0.0, %v859
    %861 = vdwg.mxu0
    %862 = vmatprep.subr.bf16.mxu0 0
    %863 = vmatpush1.bf16.msra.mxu0 %v773
    %864 = vmatprep.subr.bf16.mxu0 0
    %865 = vmatpush1.bf16.msra.mxu0 %v776
    %866 = vmatprep.subr.bf16.mxu0 0
    %867 = vmatpush1.bf16.msra.mxu0 %v779
    %868 = vmatprep.subr.bf16.mxu0 0
    %869 = vmatpush1.bf16.msra.mxu0 %v782
    %870 = vmatprep.subr.bf16.mxu0 0
    %871 = vmatpush1.bf16.msra.mxu0 %v785
    %872 = vmatprep.subr.bf16.mxu0 0
    %873 = vmatpush1.bf16.msra.mxu0 %v788
    %874 = vmatprep.subr.bf16.mxu0 0
    %875 = vmatpush1.bf16.msra.mxu0 %v791
    %876 = vmatprep.subr.bf16.mxu0 0
    %877 = vmatpush1.bf16.msra.mxu0 %v794
    %878 = vmatprep.subr.bf16.mxu0 0
    %879 = vmatpush1.bf16.msra.mxu0 0
    %880 = vmatprep.subr.bf16.mxu0 0
    %881 = vmatpush1.bf16.msra.mxu0 0
    %882 = vmatprep.subr.bf16.mxu0 0
    %883 = vmatpush1.bf16.msra.mxu0 0
    %884 = vmatprep.subr.bf16.mxu0 0
    %885 = vmatpush1.bf16.msra.mxu0 0
    %886 = vmatprep.subr.bf16.mxu0 0
    %887 = vmatpush1.bf16.msra.mxu0 0
    %888 = vmatprep.subr.bf16.mxu0 0
    %889 = vmatpush1.bf16.msra.mxu0 0
    %890 = vmatprep.subr.bf16.mxu0 0
    %891 = vmatpush1.bf16.msra.mxu0 0
    %892 = vmatprep.subr.bf16.mxu0 0
    %893 = vmatpush1.bf16.msra.mxu0 0
    %894 = vmatprep.mubr.bf16.mxu0 0
    %895 = vmatmul.mubr.bf16.gmra.mrb[0].mxu0 %v689
    %v896 = vpop.f32.mrb[0].mxu0
    %v897 = vadd.f32 0.0, %v896
    %v898 = vpop.f32.mrb[0].mxu0
    %v899 = vpop.f32.mrb[0].mxu0
    %v900 = vadd.f32 0.0, %v899
    %v901 = vpop.f32.mrb[0].mxu0
    %902 = vdwg.mxu0
    %v903 = vadd.f32 %v605, %v854
    %v904 = vadd.f32 %v607, %v856
    %v905 = vadd.f32 %v648, %v897
    %v906 = vadd.f32 %v609, %v858
    %v907 = vadd.f32 %v611, %v860
    %v908 = vadd.f32 %v651, %v900
    %s909 = scalar_lea.vmem [#allocation2], 576
    %v910 = vld [vmem:[%s909] sm:$0xff]
    %v911 = vld [vmem:[%s909 + $0x8] sm:$0xf]
    %v912 = vld [vmem:[%s909 + $0xc] sm:$0xff]
    %v913 = vld [vmem:[%s909 + $0x14] sm:$0xf]
    %v914 = vld [vmem:[%s909 + $0x18] sm:$0xff]
    %v915 = vld [vmem:[%s909 + $0x20] sm:$0xf]
    %v916 = vld [vmem:[%s909 + $0x24] sm:$0xff]
    %v917 = vld [vmem:[%s909 + $0x2c] sm:$0xf]
    %v918 = vld [vmem:[%s909 + $0x30] sm:$0xff]
    %v919 = vld [vmem:[%s909 + $0x38] sm:$0xf]
    %v920 = vld [vmem:[%s909 + $0x3c] sm:$0xff]
    %v921 = vld [vmem:[%s909 + $0x44] sm:$0xf]
    %v922 = vld [vmem:[%s909 + $0x48] sm:$0xff]
    %v923 = vld [vmem:[%s909 + $0x50] sm:$0xf]
    %v924 = vld [vmem:[%s909 + $0x54] sm:$0xff]
    %v925 = vld [vmem:[%s909 + $0x5c] sm:$0xf]
    %v926 = vld [vmem:[%s909 + $0x60] sm:$0xff]
    %v927 = vld [vmem:[%s909 + $0x68] sm:$0xf]
    %v928 = vld [vmem:[%s909 + $0x6c] sm:$0xff]
    %v929 = vld [vmem:[%s909 + $0x74] sm:$0xf]
    %v930 = vld [vmem:[%s909 + $0x78] sm:$0xff]
    %v931 = vld [vmem:[%s909 + $0x80] sm:$0xf]
    %v932 = vld [vmem:[%s909 + $0x84] sm:$0xff]
    %v933 = vld [vmem:[%s909 + $0x8c] sm:$0xf]
    %v934 = vld [vmem:[%s909 + $0x90] sm:$0xff]
    %v935 = vld [vmem:[%s909 + $0x98] sm:$0xf]
    %v936 = vld [vmem:[%s909 + $0x9c] sm:$0xff]
    %v937 = vld [vmem:[%s909 + $0xa4] sm:$0xf]
    %v938 = vld [vmem:[%s909 + $0xa8] sm:$0xff]
    %v939 = vld [vmem:[%s909 + $0xb0] sm:$0xf]
    %v940 = vld [vmem:[%s909 + $0xb4] sm:$0xff]
    %v941 = vld [vmem:[%s909 + $0xbc] sm:$0xf]
    %v942 = vunpack.c.l.b16 %v135
    %v943 = vunpack.c.l.b16 %v145
    %v944 = vpack.c.b16 %v943, %v942
    %v978 = vunpack.c.h.b16 %v910
    %v979 = vunpack.c.l.b16 %v911
    %v980 = vunpack.c.h.b16 %v912
    %v981 = vunpack.c.l.b16 %v913
    %v982 = vunpack.c.h.b16 %v914
    %v983 = vunpack.c.l.b16 %v915
    %v984 = vunpack.c.h.b16 %v916
    %v985 = vunpack.c.l.b16 %v917
    %v986 = vunpack.c.h.b16 %v918
    %v987 = vunpack.c.l.b16 %v919
    %v988 = vunpack.c.h.b16 %v920
    %v989 = vunpack.c.l.b16 %v921
    %v990 = vunpack.c.h.b16 %v922
    %v991 = vunpack.c.l.b16 %v923
    %v992 = vunpack.c.h.b16 %v924
    %v993 = vunpack.c.l.b16 %v925
    %v994 = vunpack.c.h.b16 %v926
    %v995 = vunpack.c.l.b16 %v927
    %v996 = vunpack.c.h.b16 %v928
    %v997 = vunpack.c.l.b16 %v929
    %v998 = vunpack.c.h.b16 %v930
    %v999 = vunpack.c.l.b16 %v931
    %v1000 = vunpack.c.h.b16 %v932
    %v1001 = vunpack.c.l.b16 %v933
    %v1002 = vunpack.c.h.b16 %v934
    %v1003 = vunpack.c.l.b16 %v935
    %v1004 = vunpack.c.h.b16 %v936
    %v1005 = vunpack.c.l.b16 %v937
    %v1006 = vunpack.c.h.b16 %v938
    %v1007 = vunpack.c.l.b16 %v939
    %v1008 = vunpack.c.h.b16 %v940
    %v1009 = vunpack.c.l.b16 %v941
    %v1010 = vpack.c.b16 %v980, %v978
    %v1011 = vpack.c.b16 %v981, %v979
    %v1012 = vpack.c.b16 %v984, %v982
    %v1013 = vpack.c.b16 %v985, %v983
    %v1014 = vpack.c.b16 %v988, %v986
    %v1015 = vpack.c.b16 %v989, %v987
    %v1016 = vpack.c.b16 %v992, %v990
    %v1017 = vpack.c.b16 %v993, %v991
    %v1018 = vpack.c.b16 %v996, %v994
    %v1019 = vpack.c.b16 %v997, %v995
    %v1020 = vpack.c.b16 %v1000, %v998
    %v1021 = vpack.c.b16 %v1001, %v999
    %v1022 = vpack.c.b16 %v1004, %v1002
    %v1023 = vpack.c.b16 %v1005, %v1003
    %v1024 = vpack.c.b16 %v1008, %v1006
    %v1025 = vpack.c.b16 %v1009, %v1007
    %1042 = vmatprep.subr.bf16.mxu0 %v1011
    %1043 = vmatpush1.bf16.msra.mxu0 %v1010
    %1044 = vmatprep.subr.bf16.mxu0 %v1013
    %1045 = vmatpush1.bf16.msra.mxu0 %v1012
    %1046 = vmatprep.subr.bf16.mxu0 %v1015
    %1047 = vmatpush1.bf16.msra.mxu0 %v1014
    %1048 = vmatprep.subr.bf16.mxu0 %v1017
    %1049 = vmatpush1.bf16.msra.mxu0 %v1016
    %1050 = vmatprep.subr.bf16.mxu0 %v1019
    %1051 = vmatpush1.bf16.msra.mxu0 %v1018
    %1052 = vmatprep.subr.bf16.mxu0 %v1021
    %1053 = vmatpush1.bf16.msra.mxu0 %v1020
    %1054 = vmatprep.subr.bf16.mxu0 %v1023
    %1055 = vmatpush1.bf16.msra.mxu0 %v1022
    %1056 = vmatprep.subr.bf16.mxu0 %v1025
    %1057 = vmatpush1.bf16.msra.mxu0 %v1024
    %1058 = vmatprep.subr.bf16.mxu0 0
    %1059 = vmatpush1.bf16.msra.mxu0 0
    %1060 = vmatprep.subr.bf16.mxu0 0
    %1061 = vmatpush1.bf16.msra.mxu0 0
    %1062 = vmatprep.subr.bf16.mxu0 0
    %1063 = vmatpush1.bf16.msra.mxu0 0
    %1064 = vmatprep.subr.bf16.mxu0 0
    %1065 = vmatpush1.bf16.msra.mxu0 0
    %1066 = vmatprep.subr.bf16.mxu0 0
    %1067 = vmatpush1.bf16.msra.mxu0 0
    %1068 = vmatprep.subr.bf16.mxu0 0
    %1069 = vmatpush1.bf16.msra.mxu0 0
    %1070 = vmatprep.subr.bf16.mxu0 0
    %1071 = vmatpush1.bf16.msra.mxu0 0
    %1072 = vmatprep.subr.bf16.mxu0 0
    %1073 = vmatpush1.bf16.msra.mxu0 0
    %1074 = vmatprep.mubr.bf16.mxu0 0
    %1075 = vmatmul.mubr.bf16.gmra.mrb[0].mxu0 %v944
    %v1076 = vpop.f32.mrb[0].mxu0
    %v1077 = vadd.f32 0.0, %v1076
    %v1078 = vpop.f32.mrb[0].mxu0
    %v1079 = vadd.f32 0.0, %v1078
    %v1080 = vpop.f32.mrb[0].mxu0
    %v1081 = vadd.f32 0.0, %v1080
    %v1082 = vpop.f32.mrb[0].mxu0
    %v1083 = vadd.f32 0.0, %v1082
    %1084 = vdwg.mxu0
    %s1085 = scalar_lea.vmem [#allocation2], 768
    %v1086 = vld [vmem:[%s1085 + $0x8] sm:$0xf]
    %v1087 = vld [vmem:[%s1085 + $0x14] sm:$0xf]
    %v1088 = vld [vmem:[%s1085 + $0x20] sm:$0xf]
    %v1089 = vld [vmem:[%s1085 + $0x2c] sm:$0xf]
    %v1090 = vld [vmem:[%s1085 + $0x38] sm:$0xf]
    %v1091 = vld [vmem:[%s1085 + $0x44] sm:$0xf]
    %v1092 = vld [vmem:[%s1085 + $0x50] sm:$0xf]
    %v1093 = vld [vmem:[%s1085 + $0x5c] sm:$0xf]
    %v1094 = vld [vmem:[%s1085 + $0x68] sm:$0xf]
    %v1095 = vld [vmem:[%s1085 + $0x74] sm:$0xf]
    %v1096 = vld [vmem:[%s1085 + $0x80] sm:$0xf]
    %v1097 = vld [vmem:[%s1085 + $0x8c] sm:$0xf]
    %v1098 = vld [vmem:[%s1085 + $0x98] sm:$0xf]
    %v1099 = vld [vmem:[%s1085 + $0xa4] sm:$0xf]
    %v1100 = vld [vmem:[%s1085 + $0xb0] sm:$0xf]
    %v1101 = vld [vmem:[%s1085 + $0xbc] sm:$0xf]
    %v1102 = vunpack.c.l.b16 %v152
    %v1103 = vunpack.c.l.b16 %v156
    %v1104 = vpack.c.b16 %v1103, %v1102
    %v1122 = vunpack.c.l.b16 %v1086
    %v1123 = vunpack.c.l.b16 %v1087
    %v1124 = vunpack.c.l.b16 %v1088
    %v1125 = vunpack.c.l.b16 %v1089
    %v1126 = vunpack.c.l.b16 %v1090
    %v1127 = vunpack.c.l.b16 %v1091
    %v1128 = vunpack.c.l.b16 %v1092
    %v1129 = vunpack.c.l.b16 %v1093
    %v1130 = vunpack.c.l.b16 %v1094
    %v1131 = vunpack.c.l.b16 %v1095
    %v1132 = vunpack.c.l.b16 %v1096
    %v1133 = vunpack.c.l.b16 %v1097
    %v1134 = vunpack.c.l.b16 %v1098
    %v1135 = vunpack.c.l.b16 %v1099
    %v1136 = vunpack.c.l.b16 %v1100
    %v1137 = vunpack.c.l.b16 %v1101
    %v1138 = vpack.c.b16 %v1123, %v1122
    %v1139 = vpack.c.b16 %v1125, %v1124
    %v1140 = vpack.c.b16 %v1127, %v1126
    %v1141 = vpack.c.b16 %v1129, %v1128
    %v1142 = vpack.c.b16 %v1131, %v1130
    %v1143 = vpack.c.b16 %v1133, %v1132
    %v1144 = vpack.c.b16 %v1135, %v1134
    %v1145 = vpack.c.b16 %v1137, %v1136
    %1154 = vmatprep.subr.bf16.mxu0 0
    %1155 = vmatpush1.bf16.msra.mxu0 %v1138
    %1156 = vmatprep.subr.bf16.mxu0 0
    %1157 = vmatpush1.bf16.msra.mxu0 %v1139
    %1158 = vmatprep.subr.bf16.mxu0 0
    %1159 = vmatpush1.bf16.msra.mxu0 %v1140
    %1160 = vmatprep.subr.bf16.mxu0 0
    %1161 = vmatpush1.bf16.msra.mxu0 %v1141
    %1162 = vmatprep.subr.bf16.mxu0 0
    %1163 = vmatpush1.bf16.msra.mxu0 %v1142
    %1164 = vmatprep.subr.bf16.mxu0 0
    %1165 = vmatpush1.bf16.msra.mxu0 %v1143
    %1166 = vmatprep.subr.bf16.mxu0 0
    %1167 = vmatpush1.bf16.msra.mxu0 %v1144
    %1168 = vmatprep.subr.bf16.mxu0 0
    %1169 = vmatpush1.bf16.msra.mxu0 %v1145
    %1170 = vmatprep.subr.bf16.mxu0 0
    %1171 = vmatpush1.bf16.msra.mxu0 0
    %1172 = vmatprep.subr.bf16.mxu0 0
    %1173 = vmatpush1.bf16.msra.mxu0 0
    %1174 = vmatprep.subr.bf16.mxu0 0
    %1175 = vmatpush1.bf16.msra.mxu0 0
    %1176 = vmatprep.subr.bf16.mxu0 0
    %1177 = vmatpush1.bf16.msra.mxu0 0
    %1178 = vmatprep.subr.bf16.mxu0 0
    %1179 = vmatpush1.bf16.msra.mxu0 0
    %1180 = vmatprep.subr.bf16.mxu0 0
    %1181 = vmatpush1.bf16.msra.mxu0 0
    %1182 = vmatprep.subr.bf16.mxu0 0
    %1183 = vmatpush1.bf16.msra.mxu0 0
    %1184 = vmatprep.subr.bf16.mxu0 0
    %1185 = vmatpush1.bf16.msra.mxu0 0
    %1186 = vmatprep.mubr.bf16.mxu0 0
    %1187 = vmatmul.mubr.bf16.gmra.mrb[0].mxu0 %v1104
    %v1188 = vpop.f32.mrb[0].mxu0
    %v1189 = vadd.f32 0.0, %v1188
    %v1190 = vpop.f32.mrb[0].mxu0
    %v1191 = vpop.f32.mrb[0].mxu0
    %v1192 = vadd.f32 0.0, %v1191
    %v1193 = vpop.f32.mrb[0].mxu0
    %1194 = vdwg.mxu0
    %v1195 = vadd.f32 %v904, %v1077
    %v1196 = vadd.f32 %v907, %v1081
    %v1197 = vadd.f32 %v905, %v1079
    %v1198 = vadd.f32 %v908, %v1083
    %v1199 = vadd.f32 %v1197, %v1189
    %v1200 = vadd.f32 %v1198, %v1192
    %v1201 = vlaneseq
    %v1202 = vshrl.u32 %v1201, 7
    %vm1203 = vcmp.le.s32.totalorder %v1202, 5
    %v1204 = vsel %vm1203, %v903, -inf
    %v1205 = vsel %vm1203, %v906, -inf
    %v1206 = vrot.slane %v1204, 4
    %v1207 = vmax.f32 %v1204, %v1206
    %v1208 = vrot.slane %v1207, 2
    %v1209 = vmax.f32 %v1207, %v1208
    %v1210 = vrot.slane %v1209, 1
    %v1211 = vmax.f32 %v1209, %v1210
    %v1212 = vrot.slane %v1205, 4
    %v1213 = vmax.f32 %v1205, %v1212
    %v1214 = vrot.slane %v1213, 2
    %v1215 = vmax.f32 %v1213, %v1214
    %v1216 = vrot.slane %v1215, 1
    %v1217 = vmax.f32 %v1215, %v1216
    %vm1218 = vcmp.le.s32.totalorder %v1202, 4
    %v1219 = vsel %vm1218, %v1195, -inf
    %v1220 = vsel %vm1218, %v1196, -inf
    %v1221 = vrot.slane %v1219, 4
    %v1222 = vmax.f32 %v1219, %v1221
    %v1223 = vrot.slane %v1222, 2
    %v1224 = vmax.f32 %v1222, %v1223
    %v1225 = vrot.slane %v1224, 1
    %v1226 = vmax.f32 %v1224, %v1225
    %v1227 = vrot.slane %v1220, 4
    %v1228 = vmax.f32 %v1220, %v1227
    %v1229 = vrot.slane %v1228, 2
    %v1230 = vmax.f32 %v1228, %v1229
    %v1231 = vrot.slane %v1230, 1
    %v1232 = vmax.f32 %v1230, %v1231
    %vm1233 = vcmp.le.s32.totalorder %v1202, 3
    %v1234 = vsel %vm1233, %v1199, -inf
    %v1235 = vsel %vm1233, %v1200, -inf
    %v1236 = vrot.slane %v1234, 4
    %v1237 = vmax.f32 %v1234, %v1236
    %v1238 = vrot.slane %v1237, 2
    %v1239 = vmax.f32 %v1237, %v1238
    %v1240 = vrot.slane %v1239, 1
    %v1241 = vmax.f32 %v1239, %v1240
    %v1242 = vrot.slane %v1235, 4
    %v1243 = vmax.f32 %v1235, %v1242
    %v1244 = vrot.slane %v1243, 2
    %v1245 = vmax.f32 %v1243, %v1244
    %v1246 = vrot.slane %v1245, 1
    %v1247 = vmax.f32 %v1245, %v1246
    %vm1250 = vcmask 1041409
    %v1251 = vsel %vm1250, %v1217, %v1211
    %v1255 = vsel %vm1250, %v1232, %v1226
    %v1259 = vsel %vm1250, %v1247, %v1241
    %v1261 = vld [vmem:[#allocation5] sm:$0x7]
    %v1263 = vlaneseq
    %v1264 = vshrl.u32 %v1263, 7
    %v1265 = vsub.s32 0, %v1264
    %v1266 = vrot.slane %v1261, %v1265
    %v1267 = vlaneseq
    %v1268 = vshrl.u32 %v1267, 7
    %v1269 = vsub.s32 1, %v1268
    %v1270 = vrot.slane %v1261, %v1269
    %v1271 = vlaneseq
    %v1272 = vshrl.u32 %v1271, 7
    %v1273 = vsub.s32 2, %v1272
    %v1274 = vrot.slane %v1261, %v1273
    %v1278 = vadd.f32 %v1251, %v1266
    %v1279 = vadd.f32 %v1255, %v1270
    %v1280 = vadd.f32 %v1259, %v1274
    %v1281 = vmax.f32 %v1278, 0.0
    %v1282 = vmax.f32 %v1279, 0.0
    %v1283 = vmax.f32 %v1280, 0.0
    %v1284 = vld [vmem:[#allocation7] sm:$0xff]
    %v1285 = vld [vmem:[#allocation7 + $0x8] sm:$0xff]
    %v1286 = vld [vmem:[#allocation7 + $0x10] sm:$0xff]
    %v1287 = vld [vmem:[#allocation7 + $0x18] sm:$0xff]
    %v1288 = vld [vmem:[#allocation7 + $0x20] sm:$0xff]
    %v1289 = vld [vmem:[#allocation7 + $0x28] sm:$0xff]
    %v1290 = vld [vmem:[#allocation7 + $0x30] sm:$0xff]
    %v1291 = vld [vmem:[#allocation7 + $0x38] sm:$0xff]
    %v1292 = vld [vmem:[#allocation7 + $0x40] sm:$0xff]
    %v1293 = vld [vmem:[#allocation7 + $0x48] sm:$0xff]
    %v1294 = vld [vmem:[#allocation7 + $0x50] sm:$0xff]
    %v1295 = vld [vmem:[#allocation7 + $0x58] sm:$0xff]
    %v1296 = vld [vmem:[#allocation7 + $0x60] sm:$0xff]
    %v1297 = vld [vmem:[#allocation7 + $0x68] sm:$0xff]
    %v1298 = vld [vmem:[#allocation7 + $0x70] sm:$0xff]
    %v1299 = vld [vmem:[#allocation7 + $0x78] sm:$0xff]
    %v1300 = vld [vmem:[#allocation7 + $0x80] sm:$0xff]
    %v1301 = vld [vmem:[#allocation7 + $0x88] sm:$0xff]
    %v1302 = vld [vmem:[#allocation7 + $0x90] sm:$0xff]
    %v1303 = vld [vmem:[#allocation7 + $0x98] sm:$0xff]
    %v1304 = vld [vmem:[#allocation7 + $0xa0] sm:$0xff]
    %v1305 = vld [vmem:[#allocation7 + $0xa8] sm:$0xff]
    %v1306 = vld [vmem:[#allocation7 + $0xb0] sm:$0xff]
    %v1307 = vld [vmem:[#allocation7 + $0xb8] sm:$0xff]
    %v1308 = vld [vmem:[#allocation7 + $0xc0] sm:$0xff]
    %v1309 = vld [vmem:[#allocation7 + $0xc8] sm:$0xff]
    %v1310 = vld [vmem:[#allocation7 + $0xd0] sm:$0xff]
    %v1311 = vld [vmem:[#allocation7 + $0xd8] sm:$0xff]
    %v1312 = vld [vmem:[#allocation7 + $0xe0] sm:$0xff]
    %v1313 = vld [vmem:[#allocation7 + $0xe8] sm:$0xff]
    %v1314 = vld [vmem:[#allocation7 + $0xf0] sm:$0xff]
    %v1315 = vld [vmem:[#allocation7 + $0xf8] sm:$0xff]
    %v1316 = vld [vmem:[#allocation7 + $0x100] sm:$0xff]
    %v1317 = vld [vmem:[#allocation7 + $0x108] sm:$0xff]
    %v1318 = vld [vmem:[#allocation7 + $0x110] sm:$0xff]
    %v1319 = vld [vmem:[#allocation7 + $0x118] sm:$0xff]
    %v1320 = vld [vmem:[#allocation7 + $0x120] sm:$0xff]
    %v1321 = vld [vmem:[#allocation7 + $0x128] sm:$0xff]
    %v1322 = vld [vmem:[#allocation7 + $0x130] sm:$0xff]
    %v1323 = vld [vmem:[#allocation7 + $0x138] sm:$0xff]
    %v1324 = vld [vmem:[#allocation7 + $0x140] sm:$0xff]
    %v1325 = vld [vmem:[#allocation7 + $0x148] sm:$0xff]
    %v1326 = vld [vmem:[#allocation7 + $0x150] sm:$0xff]
    %v1327 = vld [vmem:[#allocation7 + $0x158] sm:$0xff]
    %v1328 = vld [vmem:[#allocation7 + $0x160] sm:$0xff]
    %v1329 = vld [vmem:[#allocation7 + $0x168] sm:$0xff]
    %v1330 = vld [vmem:[#allocation7 + $0x170] sm:$0xff]
    %v1331 = vld [vmem:[#allocation7 + $0x178] sm:$0xff]
    %v1332 = vld [vmem:[#allocation8] sm:$0x1]
    %v1334 = vlaneseq
    %v1335 = vshrl.u32 %v1334, 7
    %v1336 = vsub.s32 0, %v1335
    %v1337 = vrot.slane %v1332, %v1336
    %1339 = vmatprep.subr.mxu0 0.0
    %1340 = vmatpush1.msra.mxu0 %v1284
    %1341 = vmatprep.subr.mxu0 0.0
    %1342 = vmatpush1.msra.mxu0 %v1285
    %1343 = vmatprep.subr.mxu0 0.0
    %1344 = vmatpush1.msra.mxu0 %v1286
    %1345 = vmatprep.subr.mxu0 0.0
    %1346 = vmatpush1.msra.mxu0 %v1287
    %1347 = vmatprep.subr.mxu0 0.0
    %1348 = vmatpush1.msra.mxu0 %v1288
    %1349 = vmatprep.subr.mxu0 0.0
    %1350 = vmatpush1.msra.mxu0 %v1289
    %1351 = vmatprep.subr.mxu0 0.0
    %1352 = vmatpush1.msra.mxu0 %v1290
    %1353 = vmatprep.subr.mxu0 0.0
    %1354 = vmatpush1.msra.mxu0 %v1291
    %1355 = vmatprep.subr.mxu0 0.0
    %1356 = vmatpush1.msra.mxu0 %v1292
    %1357 = vmatprep.subr.mxu0 0.0
    %1358 = vmatpush1.msra.mxu0 %v1293
    %1359 = vmatprep.subr.mxu0 0.0
    %1360 = vmatpush1.msra.mxu0 %v1294
    %1361 = vmatprep.subr.mxu0 0.0
    %1362 = vmatpush1.msra.mxu0 %v1295
    %1363 = vmatprep.subr.mxu0 0.0
    %1364 = vmatpush1.msra.mxu0 %v1296
    %1365 = vmatprep.subr.mxu0 0.0
    %1366 = vmatpush1.msra.mxu0 %v1297
    %1367 = vmatprep.subr.mxu0 0.0
    %1368 = vmatpush1.msra.mxu0 %v1298
    %1369 = vmatprep.subr.mxu0 0.0
    %1370 = vmatpush1.msra.mxu0 %v1299
    %1371 = vmatprep.subr.mxu0 0.0
    %1372 = vmatpush1.msra.mxu0 %v1300
    %1373 = vmatprep.subr.mxu0 0.0
    %1374 = vmatpush1.msra.mxu0 %v1301
    %1375 = vmatprep.subr.mxu0 0.0
    %1376 = vmatpush1.msra.mxu0 %v1302
    %1377 = vmatprep.subr.mxu0 0.0
    %1378 = vmatpush1.msra.mxu0 %v1303
    %1379 = vmatprep.subr.mxu0 0.0
    %1380 = vmatpush1.msra.mxu0 %v1304
    %1381 = vmatprep.subr.mxu0 0.0
    %1382 = vmatpush1.msra.mxu0 %v1305
    %1383 = vmatprep.subr.mxu0 0.0
    %1384 = vmatpush1.msra.mxu0 %v1306
    %1385 = vmatprep.subr.mxu0 0.0
    %1386 = vmatpush1.msra.mxu0 %v1307
    %1387 = vmatprep.subr.mxu0 0.0
    %1388 = vmatpush1.msra.mxu0 %v1308
    %1389 = vmatprep.subr.mxu0 0.0
    %1390 = vmatpush1.msra.mxu0 %v1309
    %1391 = vmatprep.subr.mxu0 0.0
    %1392 = vmatpush1.msra.mxu0 %v1310
    %1393 = vmatprep.subr.mxu0 0.0
    %1394 = vmatpush1.msra.mxu0 %v1311
    %1395 = vmatprep.subr.mxu0 0.0
    %1396 = vmatpush1.msra.mxu0 %v1312
    %1397 = vmatprep.subr.mxu0 0.0
    %1398 = vmatpush1.msra.mxu0 %v1313
    %1399 = vmatprep.subr.mxu0 0.0
    %1400 = vmatpush1.msra.mxu0 %v1314
    %1401 = vmatprep.subr.mxu0 0.0
    %1402 = vmatpush1.msra.mxu0 %v1315
    %1403 = vmatprep.mubr.f32.mxu0 %v1282
    %1404 = vmatmul.mubr.f32.gmra.mrb[0].mxu0 %v1281
    %v1405 = vpop.f32.mrb[0].mxu0
    %v1406 = vadd.f32 %v1337, %v1405
    %v1407 = vpop.f32.mrb[0].mxu0
    %1408 = vdwg.mxu0
    %1409 = vmatprep.subr.mxu0 0.0
    %1410 = vmatpush1.msra.mxu0 %v1316
    %1411 = vmatprep.subr.mxu0 0.0
    %1412 = vmatpush1.msra.mxu0 %v1317
    %1413 = vmatprep.subr.mxu0 0.0
    %1414 = vmatpush1.msra.mxu0 %v1318
    %1415 = vmatprep.subr.mxu0 0.0
    %1416 = vmatpush1.msra.mxu0 %v1319
    %1417 = vmatprep.subr.mxu0 0.0
    %1418 = vmatpush1.msra.mxu0 %v1320
    %1419 = vmatprep.subr.mxu0 0.0
    %1420 = vmatpush1.msra.mxu0 %v1321
    %1421 = vmatprep.subr.mxu0 0.0
    %1422 = vmatpush1.msra.mxu0 %v1322
    %1423 = vmatprep.subr.mxu0 0.0
    %1424 = vmatpush1.msra.mxu0 %v1323
    %1425 = vmatprep.subr.mxu0 0.0
    %1426 = vmatpush1.msra.mxu0 %v1324
    %1427 = vmatprep.subr.mxu0 0.0
    %1428 = vmatpush1.msra.mxu0 %v1325
    %1429 = vmatprep.subr.mxu0 0.0
    %1430 = vmatpush1.msra.mxu0 %v1326
    %1431 = vmatprep.subr.mxu0 0.0
    %1432 = vmatpush1.msra.mxu0 %v1327
    %1433 = vmatprep.subr.mxu0 0.0
    %1434 = vmatpush1.msra.mxu0 %v1328
    %1435 = vmatprep.subr.mxu0 0.0
    %1436 = vmatpush1.msra.mxu0 %v1329
    %1437 = vmatprep.subr.mxu0 0.0
    %1438 = vmatpush1.msra.mxu0 %v1330
    %1439 = vmatprep.subr.mxu0 0.0
    %1440 = vmatpush1.msra.mxu0 %v1331
    %1441 = vmatprep.subr.mxu0 0.0
    %1442 = vmatpush1.msra.mxu0 0.0
    %1443 = vmatprep.subr.mxu0 0.0
    %1444 = vmatpush1.msra.mxu0 0.0
    %1445 = vmatprep.subr.mxu0 0.0
    %1446 = vmatpush1.msra.mxu0 0.0
    %1447 = vmatprep.subr.mxu0 0.0
    %1448 = vmatpush1.msra.mxu0 0.0
    %1449 = vmatprep.subr.mxu0 0.0
    %1450 = vmatpush1.msra.mxu0 0.0
    %1451 = vmatprep.subr.mxu0 0.0
    %1452 = vmatpush1.msra.mxu0 0.0
    %1453 = vmatprep.subr.mxu0 0.0
    %1454 = vmatpush1.msra.mxu0 0.0
    %1455 = vmatprep.subr.mxu0 0.0
    %1456 = vmatpush1.msra.mxu0 0.0
    %1457 = vmatprep.subr.mxu0 0.0
    %1458 = vmatpush1.msra.mxu0 0.0
    %1459 = vmatprep.subr.mxu0 0.0
    %1460 = vmatpush1.msra.mxu0 0.0
    %1461 = vmatprep.subr.mxu0 0.0
    %1462 = vmatpush1.msra.mxu0 0.0
    %1463 = vmatprep.subr.mxu0 0.0
    %1464 = vmatpush1.msra.mxu0 0.0
    %1465 = vmatprep.subr.mxu0 0.0
    %1466 = vmatpush1.msra.mxu0 0.0
    %1467 = vmatprep.subr.mxu0 0.0
    %1468 = vmatpush1.msra.mxu0 0.0
    %1469 = vmatprep.subr.mxu0 0.0
    %1470 = vmatpush1.msra.mxu0 0.0
    %1471 = vmatprep.subr.mxu0 0.0
    %1472 = vmatpush1.msra.mxu0 0.0
    %1473 = vmatprep.mubr.f32.mxu0 0.0
    %1474 = vmatmul.mubr.f32.gmra.mrb[0].mxu0 %v1283
    %v1475 = vpop.f32.mrb[0].mxu0
    %v1476 = vadd.f32 %v1406, %v1475
    %v1477 = vpop.f32.mrb[0].mxu0
    %1478 = vdwg.mxu0
    %1479 = vst [vmem:[#allocation10] sm:$0x3] %v1476
    // Predicated region
    $region38: #{liar_model_forward.1} parent=1 // pred_check
      _
    $region39: #{liar_model_forward.1} parent=1 // pred_check_branch
      %1481 = sbr.rel (0) target = $region41
    $region40: #{liar_model_forward.1} parent=1 // pred_region
      %s1483 = ssub.s32 32, 32
      %1484 = vsyncadd [#allocation4], %s1483
      %s1486 = sshll.u32 [#allocation10], 4
      %s1487 = int_to_ptr.vmem [resolvable:$true] %s1486
      %1489 = dma.vmem_to_hbm [thread:$0]  %s1487, 32, %s5, [#allocation4]
    $region41: #{liar_model_forward.1} parent=1 // pred_fallthru
      _
    // Predicated region
    $region42: #{liar_model_forward.1} parent=1 // pred_check
      _
    $region43: #{liar_model_forward.1} parent=1 // pred_check_branch
      %1491 = sbr.rel (0) target = $region45
    $region44: #{liar_model_forward.1} parent=1 // pred_region
      %1492 = dma.done [#allocation4], 32
    $region45: #{liar_model_forward.1} parent=1 // pred_fallthru
      _
    %1493 = vsyncpa [#allocation3], 1
    %1494 = vsyncpa [#allocation6], 1
    %1495 = vsyncpa [#allocation9], 1
    %1496 = vsyncpa [#allocation4], 1

</llo_original>
